<compile_context>
chip_gen: v7x
topology: tpu7x:2x2x1
jax: 0.10.0
libtpu: 0.0.40
codegen_flags: <defaults>
</compile_context>

<pallas_src>
import jax
import jax.numpy as jnp
import numpy as np
from jax.experimental import pallas as pl
from jax.experimental.pallas import tpu as pltpu


def _ntn_kernel(e1_ref, e2_ref, w_ref, exp_ref, red_ref, out_ref):
    """e1/e2: (Bt, Da) f32; w/exp: (Da, Da*T) bf16; red: (Da*T, Tp) f32;
    out: (Bt, Tp) f32."""
    e1 = e1_ref[...].astype(jnp.bfloat16)                 # (Bt, Da)
    e2 = e2_ref[...].astype(jnp.bfloat16)                 # (Bt, Da)

    # s1[b, d*T + t] = sum_i e1a[b, i] * W_aug[i, d, t]   (bf16 MXU, f32 acc)
    s1 = jnp.dot(e1, w_ref[...], preferred_element_type=jnp.float32)

    # e2x[b, d*T + t] = e2a[b, d]   (one-hot expand on the MXU: exact, lane-dense)
    e2x = jnp.dot(e2, exp_ref[...], preferred_element_type=jnp.float32)

    # One full-width elementwise multiply (VPU), no sub-vreg slicing.
    prod = s1 * e2x                                       # (Bt, Da*T) f32

    # out[b, tp] = sum_d prod[b, d*T + tp]   (one-hot reduce, Tp=128 lane-dense)
    out = jnp.dot(prod, red_ref[...], preferred_element_type=jnp.float32)

    out_ref[...] = jnp.maximum(out, 0.0)


def _round_up(x, m):
    return (x + m - 1) // m * m


def prepare_ntn_params(weight_matrix, weight_matrix_block, bias):
    """One-time parameter prep (hoisted out of the per-call forward).

    Returns (w2d, exp_mat, red_mat):
      w2d     (Da, Da*T) bf16 : augmented bilinear weights, column c = d*T + t
      exp_mat (Da, Da*T) bf16 : one-hot, exp_mat[d', d*T+t] = [d' == d]
      red_mat (Da*T, Tp) f32  : one-hot, red_mat[d*T+t, tp] = [t == tp], Tp >= 128
    """
    D, _, T = weight_matrix.shape
    Da = D + 1
    Tp = _round_up(max(T, 128), 128)                      # lane-dense output width

    # Fold block weights + bias into one augmented bilinear form:
    #   out = relu([e1,1] @ W_aug[:,:,t] @ [e2,1])
    W_aug = jnp.zeros((Da, Da, T), jnp.float32)
    W_aug = W_aug.at[:D, :D, :].set(weight_matrix.astype(jnp.float32))
    W_aug = W_aug.at[:D, D, :].set(weight_matrix_block[:, :D].T)   # e1-half
    W_aug = W_aug.at[D, :D, :].set(weight_matrix_block[:, D:].T)   # e2-half
    W_aug = W_aug.at[D, D, :].set(bias.reshape(-1))                # bias
    w2d = W_aug.reshape(Da, Da * T).astype(jnp.bfloat16)

    exp_mat = jnp.repeat(jnp.eye(Da, dtype=jnp.bfloat16), T, axis=1)   # (Da, Da*T)
    red_mat = jnp.tile(jnp.eye(T, Tp, dtype=jnp.float32), (Da, 1))     # (Da*T, Tp)
    return w2d, exp_mat, red_mat


@jax.jit
def tensor_network_forward(e1, e2, w2d, exp_mat, red_mat):
    """e1, e2: (B, D) f32; prepared params from prepare_ntn_params."""
    B, D = e1.shape
    Da = D + 1
    T = w2d.shape[1] // Da
    Tp = red_mat.shape[1]

    ones = jnp.ones((B, 1), jnp.float32)
    e1a = jnp.concatenate([e1.astype(jnp.float32), ones], axis=1)      # (B, Da)
    e2a = jnp.concatenate([e2.astype(jnp.float32), ones], axis=1)      # (B, Da)

    # Batch tiling: large blocks (amortize ~0.35us/step on v5e/v6e) but keep
    # the grid at >= 2 steps whenever possible so v7x megacore gets both TCs.
    Bt = max(8, min(512, _round_up(pl.cdiv(B, 2), 8)))
    Bp = _round_up(B, Bt)
    if Bp != B:
        e1a = jnp.pad(e1a, ((0, Bp - B), (0, 0)))
        e2a = jnp.pad(e2a, ((0, Bp - B), (0, 0)))

    out = pl.pallas_call(
        _ntn_kernel,
        out_shape=jax.ShapeDtypeStruct((Bp, Tp), jnp.float32),
        grid=(Bp // Bt,),
        in_specs=[
            pl.BlockSpec((Bt, Da), lambda i: (i, 0)),
            pl.BlockSpec((Bt, Da), lambda i: (i, 0)),
            pl.BlockSpec(w2d.shape, lambda i: (0, 0)),     # constant -> fetched once
            pl.BlockSpec(exp_mat.shape, lambda i: (0, 0)),  # constant -> fetched once
            pl.BlockSpec(red_mat.shape, lambda i: (0, 0)),  # constant -> fetched once
        ],
        out_specs=pl.BlockSpec((Bt, Tp), lambda i: (i, 0)),
        compiler_params=pltpu.CompilerParams(
            dimension_semantics=("parallel",)),             # shard pairs over TCs
    )(e1a, e2a, w2d, exp_mat, red_mat)

    return out[:B, :T]


def _xavier_uniform(key, shape):
    """torch.nn.init.xavier_uniform_ semantics."""
    if len(shape) > 2:
        rf = int(np.prod(shape[2:]))
        fan_in, fan_out = shape[1] * rf, shape[0] * rf
    else:
        fan_in, fan_out = shape[1], shape[0]
    bound = float(np.sqrt(6.0 / (fan_in + fan_out)))
    return jax.random.uniform(key, shape, jnp.float32, -bound, bound)


def _reference(e1, e2, W, Wb, bias):
    """float64 numpy reference (bit-exact accumulation baseline)."""
    e1 = np.asarray(e1, np.float64)
    e2 = np.asarray(e2, np.float64)
    W = np.asarray(W, np.float64)
    Wb = np.asarray(Wb, np.float64)
    bias = np.asarray(bias, np.float64)
    scoring = np.einsum("bi,idt,bd->bt", e1, W, e2)
    block = np.concatenate([e1, e2], axis=1) @ Wb.T
    return np.maximum(scoring + block + bias.reshape(-1), 0.0)


if __name__ == "__main__":
    # Many graph pairs per call; hidden dim / tensor_neurons as in a typical
    # SimGNN config.
    B, D, T = 256, 32, 16

    key = jax.random.PRNGKey(0)
    k1, k2, kw, kb, kc = jax.random.split(key, 5)

    e1 = jax.random.normal(k1, (B, D), jnp.float32)
    e2 = jax.random.normal(k2, (B, D), jnp.float32)

    weight_matrix = _xavier_uniform(kw, (D, D, T))
    weight_matrix_block = _xavier_uniform(kb, (T, 2 * D))
    bias = _xavier_uniform(kc, (T, 1))

    # One-time parameter preparation (not part of the per-call forward).
    w2d, exp_mat, red_mat = prepare_ntn_params(weight_matrix,
                                               weight_matrix_block, bias)

    out = tensor_network_forward(e1, e2, w2d, exp_mat, red_mat)
    out = jax.block_until_ready(out)
    assert out.shape == (B, T)

    # The kernel feeds e1, e2 and the weights to the MXU in bf16 (f32
    # accumulation everywhere), so round the same inputs in the reference.
    def _rnd(x):
        return np.asarray(x.astype(jnp.bfloat16).astype(jnp.float32))

    ref = _reference(_rnd(e1), _rnd(e2), _rnd(weight_matrix),
                     _rnd(weight_matrix_block), _rnd(bias))
    np.testing.assert_allclose(np.asarray(out), ref, rtol=2e-3, atol=2e-3)
    print("KERNEL_OK")
</pallas_src>

<mosaic_0001>
module attributes {stable_mosaic.version = 11 : i64} {
  func.func @_ntn_kernel(%arg0: i32, %arg1: memref<128x33xf32, #tpu.memory_space<vmem>>, %arg2: memref<128x33xf32, #tpu.memory_space<vmem>>, %arg3: memref<33x528xbf16, #tpu.memory_space<vmem>>, %arg4: memref<33x528xbf16, #tpu.memory_space<vmem>>, %arg5: memref<528x128xf32, #tpu.memory_space<vmem>>, %arg6: memref<128x128xf32, #tpu.memory_space<vmem>>) attributes {dimension_semantics = [#tpu.dimension_semantics<parallel>], iteration_bounds = array<i64: 2>, scalar_prefetch = 0 : i64, scratch_operands = 0 : i64, tpu.core_type = #tpu.core_type<tc>, window_params = [{transform_indices = @transform_0, window_bounds = array<i64: 128, 33>}, {transform_indices = @transform_1, window_bounds = array<i64: 128, 33>}, {pipeline_mode = #tpu.pipeline_mode<synchronous>, transform_indices = @transform_2, window_bounds = array<i64: 33, 528>}, {pipeline_mode = #tpu.pipeline_mode<synchronous>, transform_indices = @transform_3, window_bounds = array<i64: 33, 528>}, {pipeline_mode = #tpu.pipeline_mode<synchronous>, transform_indices = @transform_4, window_bounds = array<i64: 528, 128>}, {transform_indices = @transform_5, window_bounds = array<i64: 128, 128>}]} {
    %c0 = arith.constant 0 : index
    %c0_0 = arith.constant 0 : index
    %0 = vector.load %arg1[%c0, %c0_0] : memref<128x33xf32, #tpu.memory_space<vmem>>, vector<128x33xf32>
    %1 = arith.truncf %0 : vector<128x33xf32> to vector<128x33xbf16>
    %c0_1 = arith.constant 0 : index
    %c0_2 = arith.constant 0 : index
    %2 = vector.load %arg2[%c0_1, %c0_2] : memref<128x33xf32, #tpu.memory_space<vmem>>, vector<128x33xf32>
    %3 = arith.truncf %2 : vector<128x33xf32> to vector<128x33xbf16>
    %c0_3 = arith.constant 0 : index
    %c0_4 = arith.constant 0 : index
    %4 = vector.load %arg3[%c0_3, %c0_4] : memref<33x528xbf16, #tpu.memory_space<vmem>>, vector<33x528xbf16>
    %cst = arith.constant dense<0.000000e+00> : vector<128x528xf32>
    %5 = tpu.matmul %1, %4, %cst {dimension_numbers = #tpu.dot_dimension_numbers<[1], [0], [0], [1], [0, 0, 1, 1], [], []>} : vector<128x33xbf16>, vector<33x528xbf16>, vector<128x528xf32> -> vector<128x528xf32>
    %c0_5 = arith.constant 0 : index
    %c0_6 = arith.constant 0 : index
    %6 = vector.load %arg4[%c0_5, %c0_6] : memref<33x528xbf16, #tpu.memory_space<vmem>>, vector<33x528xbf16>
    %cst_7 = arith.constant dense<0.000000e+00> : vector<128x528xf32>
    %7 = tpu.matmul %3, %6, %cst_7 {dimension_numbers = #tpu.dot_dimension_numbers<[1], [0], [0], [1], [0, 0, 1, 1], [], []>} : vector<128x33xbf16>, vector<33x528xbf16>, vector<128x528xf32> -> vector<128x528xf32>
    %8 = arith.mulf %5, %7 : vector<128x528xf32>
    %c0_8 = arith.constant 0 : index
    %c0_9 = arith.constant 0 : index
    %9 = vector.load %arg5[%c0_8, %c0_9] : memref<528x128xf32, #tpu.memory_space<vmem>>, vector<528x128xf32>
    %cst_10 = arith.constant dense<0.000000e+00> : vector<128x128xf32>
    %10 = tpu.matmul %8, %9, %cst_10 {dimension_numbers = #tpu.dot_dimension_numbers<[1], [0], [0], [1], [0, 0, 1, 1], [], []>} : vector<128x528xf32>, vector<528x128xf32>, vector<128x128xf32> -> vector<128x128xf32>
    %cst_11 = arith.constant 0.000000e+00 : f32
    %11 = vector.broadcast %cst_11 : f32 to vector<128x128xf32>
    %12 = arith.maximumf %10, %11 : vector<128x128xf32>
    %c0_12 = arith.constant 0 : index
    %c0_13 = arith.constant 0 : index
    %13 = vector.load %arg6[%c0_12, %c0_13] : memref<128x128xf32, #tpu.memory_space<vmem>>, vector<128x128xf32>
    tpu.vector_store %arg6[%c0_12, %c0_13], %12 {strides = array<i32>} : memref<128x128xf32, #tpu.memory_space<vmem>>, vector<128x128xf32>,
    return
  }
  func.func @transform_0(%arg0: i32) -> (i32, i32) {
    %c0_i32 = arith.constant 0 : i32
    %c0_i32_0 = arith.constant 0 : i32
    return %arg0, %c0_i32 : i32, i32
  }
  func.func @transform_1(%arg0: i32) -> (i32, i32) {
    %c0_i32 = arith.constant 0 : i32
    %c0_i32_0 = arith.constant 0 : i32
    return %arg0, %c0_i32 : i32, i32
  }
  func.func @transform_2(%arg0: i32) -> (i32, i32) {
    %c0_i32 = arith.constant 0 : i32
    %c0_i32_0 = arith.constant 0 : i32
    %c0_i32_1 = arith.constant 0 : i32
    return %c0_i32, %c0_i32_0 : i32, i32
  }
  func.func @transform_3(%arg0: i32) -> (i32, i32) {
    %c0_i32 = arith.constant 0 : i32
    %c0_i32_0 = arith.constant 0 : i32
    %c0_i32_1 = arith.constant 0 : i32
    return %c0_i32, %c0_i32_0 : i32, i32
  }
  func.func @transform_4(%arg0: i32) -> (i32, i32) {
    %c0_i32 = arith.constant 0 : i32
    %c0_i32_0 = arith.constant 0 : i32
    %c0_i32_1 = arith.constant 0 : i32
    return %c0_i32, %c0_i32_0 : i32, i32
  }
  func.func @transform_5(%arg0: i32) -> (i32, i32) {
    %c0_i32 = arith.constant 0 : i32
    %c0_i32_0 = arith.constant 0 : i32
    return %arg0, %c0_i32 : i32, i32
  }
}

</mosaic_0001>

<llo_original>
// kernel: tensor_network_forward.1
$region0: #{tensor_network_forward.1}
  #allocation0 [shape = 'u32[]', space=smem, size = 0x4, offset = 0x4, fixed_abs, tag = 'smem constant byte address 0x4 - core index']
  #allocation1 [shape = 'u32[144,128]{1,0:T(1,128)}', space=vmem, size = 0x12000, scoped, tag = 'internal scratch']
  %s0 = inlined_call_operand.vmem [shape: f32[256,33], index: 0, kind: input, shape index: {}]
  %s1 = inlined_call_operand.vmem [shape: f32[256,33], index: 1, kind: input, shape index: {}]
  %s2 = inlined_call_operand.vmem [shape: bf16[33,528], index: 2, kind: input, shape index: {}]
  %s3 = inlined_call_operand.vmem [shape: bf16[33,528], index: 3, kind: input, shape index: {}]
  %s4 = inlined_call_operand.vmem [shape: f32[528,128], index: 4, kind: input, shape index: {}]
  %s5 = inlined_call_operand.vmem [shape: f32[256,128], index: 5, kind: output, shape index: {}]
  %s6 = sld [smem:[#allocation0]]
  $region53: #{tensor_network_forward.1} parent=0
    _
  %s8 = ssub.s32 1, %s6
  %s9 = scalar_select 0, %s8, %s6
  loop: start=0, step=1, limit=4
  $region2: #{tensor_network_forward.1} parent=0 // loop_pre_header
    _
  $region3: #{tensor_network_forward.1} parent=0 // loop_header
    %s11 = sphi 0, %s15
    %p12 = scmp.ge.s32.totalorder %s11, 4
    %s21 = sphi 0, %s23
    %s24 = sphi 0, %s21
    %s25 = sphi 0, %s24
    %s41 = sphi 0, %s25
    %s47 = sphi 0, %s49
    %s50 = sphi 0, %s47
    %s51 = sphi 0, %s50
    %s67 = sphi 0, %s51
    %s71 = sphi 0, %s71
    %s73 = sphi 0, %s71
    %s74 = sphi 0, %s73
    %s88 = sphi 0, %s74
    %s92 = sphi 0, %s92
    %s94 = sphi 0, %s92
    %s95 = sphi 0, %s94
    %s109 = sphi 0, %s95
    %s113 = sphi 0, %s113
    %s115 = sphi 0, %s113
    %s116 = sphi 0, %s115
    %s130 = sphi 0, %s116
    %s136 = sphi 0, %s138
    %s139 = sphi 0, %s136
    %s140 = sphi 0, %s139
    %s156 = sphi 0, %s140
  $region4: #{tensor_network_forward.1} parent=0 // loop_header_branch
    %14 = sbr.rel (%p12) target = $region8
  $region5: #{tensor_network_forward.1} parent=0 // loop_body
    %s16 = ssub.s32 %s11, 1
    %s17 = ssub.s32 %s11, 2
    %s18 = sadd.s32 %s11, 1
    %s19 = ssub.s32 %s11, %s18
    %p20 = scmp.eq.s32.totalorder %s19, 0
    %s22 = sadd.s32 %s21, 1
    %s23 = scalar_select %p20, %s21, %s22
    %p26 = pneg %p20
    %p27 = scmp.eq.s32.totalorder %s11, 1
    %p28 = por %p26, %p27
    %p29 = scmp.ne.s32.totalorder %s21, %s24
    %p30 = scmp.eq.s32.totalorder %s11, 0
    %p31 = por %p29, %p30
    %p32 = scmp.ne.s32.totalorder %s21, %s24
    %p33 = scmp.eq.s32.totalorder %s16, 1
    %p34 = por %p32, %p33
    %p35 = scmp.ne.s32.totalorder %s24, %s25
    %p36 = scmp.eq.s32.totalorder %s16, 0
    %p37 = por %p35, %p36
    %p38 = scmp.ne.s32.totalorder %s24, %s25
    %p39 = scmp.eq.s32.totalorder %s17, 1
    %p40 = por %p38, %p39
    %p42 = scmp.ne.s32.totalorder %s25, %s41
    %p43 = scmp.eq.s32.totalorder %s17, 0
    %p44 = por %p42, %p43
    %s45 = ssub.s32 %s11, %s18
    %p46 = scmp.eq.s32.totalorder %s45, 0
    %s48 = sadd.s32 %s47, 1
    %s49 = scalar_select %p46, %s47, %s48
    %p52 = pneg %p46
    %p53 = scmp.eq.s32.totalorder %s11, 1
    %p54 = por %p52, %p53
    %p55 = scmp.ne.s32.totalorder %s47, %s50
    %p56 = scmp.eq.s32.totalorder %s11, 0
    %p57 = por %p55, %p56
    %p58 = scmp.ne.s32.totalorder %s47, %s50
    %p59 = scmp.eq.s32.totalorder %s16, 1
    %p60 = por %p58, %p59
    %p61 = scmp.ne.s32.totalorder %s50, %s51
    %p62 = scmp.eq.s32.totalorder %s16, 0
    %p63 = por %p61, %p62
    %p64 = scmp.ne.s32.totalorder %s50, %s51
    %p65 = scmp.eq.s32.totalorder %s17, 1
    %p66 = por %p64, %p65
    %p68 = scmp.ne.s32.totalorder %s51, %s67
    %p69 = scmp.eq.s32.totalorder %s17, 0
    %p70 = por %p68, %p69
    %s72 = sadd.s32 %s71, 1
    %p75 = scmp.eq.s32.totalorder %s11, 1
    %p76 = scmp.ne.s32.totalorder %s71, %s73
    %p77 = scmp.eq.s32.totalorder %s11, 0
    %p78 = por %p76, %p77
    %p79 = scmp.ne.s32.totalorder %s71, %s73
    %p80 = scmp.eq.s32.totalorder %s16, 1
    %p81 = por %p79, %p80
    %p82 = scmp.ne.s32.totalorder %s73, %s74
    %p83 = scmp.eq.s32.totalorder %s16, 0
    %p84 = por %p82, %p83
    %p85 = scmp.ne.s32.totalorder %s73, %s74
    %p86 = scmp.eq.s32.totalorder %s17, 1
    %p87 = por %p85, %p86
    %p89 = scmp.ne.s32.totalorder %s74, %s88
    %p90 = scmp.eq.s32.totalorder %s17, 0
    %p91 = por %p89, %p90
    %s93 = sadd.s32 %s92, 1
    %p96 = scmp.eq.s32.totalorder %s11, 1
    %p97 = scmp.ne.s32.totalorder %s92, %s94
    %p98 = scmp.eq.s32.totalorder %s11, 0
    %p99 = por %p97, %p98
    %p100 = scmp.ne.s32.totalorder %s92, %s94
    %p101 = scmp.eq.s32.totalorder %s16, 1
    %p102 = por %p100, %p101
    %p103 = scmp.ne.s32.totalorder %s94, %s95
    %p104 = scmp.eq.s32.totalorder %s16, 0
    %p105 = por %p103, %p104
    %p106 = scmp.ne.s32.totalorder %s94, %s95
    %p107 = scmp.eq.s32.totalorder %s17, 1
    %p108 = por %p106, %p107
    %p110 = scmp.ne.s32.totalorder %s95, %s109
    %p111 = scmp.eq.s32.totalorder %s17, 0
    %p112 = por %p110, %p111
    %s114 = sadd.s32 %s113, 1
    %p117 = scmp.eq.s32.totalorder %s11, 1
    %p118 = scmp.ne.s32.totalorder %s113, %s115
    %p119 = scmp.eq.s32.totalorder %s11, 0
    %p120 = por %p118, %p119
    %p121 = scmp.ne.s32.totalorder %s113, %s115
    %p122 = scmp.eq.s32.totalorder %s16, 1
    %p123 = por %p121, %p122
    %p124 = scmp.ne.s32.totalorder %s115, %s116
    %p125 = scmp.eq.s32.totalorder %s16, 0
    %p126 = por %p124, %p125
    %p127 = scmp.ne.s32.totalorder %s115, %s116
    %p128 = scmp.eq.s32.totalorder %s17, 1
    %p129 = por %p127, %p128
    %p131 = scmp.ne.s32.totalorder %s116, %s130
    %p132 = scmp.eq.s32.totalorder %s17, 0
    %p133 = por %p131, %p132
    %s134 = ssub.s32 %s11, %s18
    %p135 = scmp.eq.s32.totalorder %s134, 0
    %s137 = sadd.s32 %s136, 1
    %s138 = scalar_select %p135, %s136, %s137
    %p141 = pneg %p135
    %p142 = scmp.eq.s32.totalorder %s11, 1
    %p143 = por %p141, %p142
    %p144 = scmp.ne.s32.totalorder %s136, %s139
    %p145 = scmp.eq.s32.totalorder %s11, 0
    %p146 = por %p144, %p145
    %p147 = scmp.ne.s32.totalorder %s136, %s139
    %p148 = scmp.eq.s32.totalorder %s16, 1
    %p149 = por %p147, %p148
    %p150 = scmp.ne.s32.totalorder %s139, %s140
    %p151 = scmp.eq.s32.totalorder %s16, 0
    %p152 = por %p150, %p151
    %p153 = scmp.ne.s32.totalorder %s139, %s140
    %p154 = scmp.eq.s32.totalorder %s17, 1
    %p155 = por %p153, %p154
    %p157 = scmp.ne.s32.totalorder %s140, %s156
    %p158 = scmp.eq.s32.totalorder %s17, 0
    %p159 = por %p157, %p158
    %p160 = scmp.le.s32.totalorder 1, %s11
    %p161 = scmp.lt.s32.totalorder %s11, 3
    %p162 = pnand %p160, %p161
    %p163 = pneg %p162
    // Predicated region
    $region9: #{tensor_network_forward.1} parent=5 // pred_check
      _
    $region10: #{tensor_network_forward.1} parent=5 // pred_check_branch
      %165 = sbr.rel (%p162) target = $region12
    $region11: #{tensor_network_forward.1} parent=5 // pred_region
      %s166 = ssub.s32 %s11, 1
      // Predicated region
      $region13: #{tensor_network_forward.1} parent=11 // pred_check
        %p167 = pneg %p84
      $region14: #{tensor_network_forward.1} parent=11 // pred_check_branch
        %169 = sbr.rel (%p167) target = $region16
      $region15: #{tensor_network_forward.1} parent=11 // pred_region
        _
      $region16: #{tensor_network_forward.1} parent=11 // pred_fallthru
        _
      // Predicated region
      $region17: #{tensor_network_forward.1} parent=11 // pred_check
        %p170 = pneg %p105
      $region18: #{tensor_network_forward.1} parent=11 // pred_check_branch
        %172 = sbr.rel (%p170) target = $region20
      $region19: #{tensor_network_forward.1} parent=11 // pred_region
        _
      $region20: #{tensor_network_forward.1} parent=11 // pred_fallthru
        _
      // Predicated region
      $region21: #{tensor_network_forward.1} parent=11 // pred_check
        %p173 = pneg %p126
      $region22: #{tensor_network_forward.1} parent=11 // pred_check_branch
        %175 = sbr.rel (%p173) target = $region24
      $region23: #{tensor_network_forward.1} parent=11 // pred_region
        _
      $region24: #{tensor_network_forward.1} parent=11 // pred_fallthru
        _
    $region12: #{tensor_network_forward.1} parent=5 // pred_fallthru
      _
    %p176 = scmp.lt.s32.totalorder %s11, 2
    // Predicated region
    $region25: #{tensor_network_forward.1} parent=5 // pred_check
      %p177 = pneg %p176
    $region26: #{tensor_network_forward.1} parent=5 // pred_check_branch
      %179 = sbr.rel (%p177) target = $region28
    $region27: #{tensor_network_forward.1} parent=5 // pred_region
      // Predicated region
      $region29: #{tensor_network_forward.1} parent=27 // pred_check
        %p180 = pneg %p31
      $region30: #{tensor_network_forward.1} parent=27 // pred_check_branch
        %182 = sbr.rel (%p180) target = $region32
      $region31: #{tensor_network_forward.1} parent=27 // pred_region
        %s183 = smul.u32 16, %s11
        %p184 = scmp.lt.s32.totalorder %s183, 31
        %s185 = scalar_select %p184, %s183, 31
        %s186 = smul.addr %s185, 8
        %s187 = scalar_lea.vmem %s0, %s186
        %s188 = smul.u32 16, %s11
      $region32: #{tensor_network_forward.1} parent=27 // pred_fallthru
        _
      // Predicated region
      $region33: #{tensor_network_forward.1} parent=27 // pred_check
        %p189 = pneg %p57
      $region34: #{tensor_network_forward.1} parent=27 // pred_check_branch
        %191 = sbr.rel (%p189) target = $region36
      $region35: #{tensor_network_forward.1} parent=27 // pred_region
        %s192 = smul.u32 16, %s11
        %p193 = scmp.lt.s32.totalorder %s192, 31
        %s194 = scalar_select %p193, %s192, 31
        %s195 = smul.addr %s194, 8
        %s196 = scalar_lea.vmem %s1, %s195
        %s197 = smul.u32 16, %s11
      $region36: #{tensor_network_forward.1} parent=27 // pred_fallthru
        _
    $region28: #{tensor_network_forward.1} parent=5 // pred_fallthru
      _
    %p198 = scmp.le.s32.totalorder 1, %s11
    %p199 = scmp.lt.s32.totalorder %s11, 3
    %p200 = pnand %p198, %p199
    %p201 = pneg %p200
    // Predicated region
    $region37: #{tensor_network_forward.1} parent=5 // pred_check
      _
    $region38: #{tensor_network_forward.1} parent=5 // pred_check_branch
      %203 = sbr.rel (%p200) target = $region40
    $region39: #{tensor_network_forward.1} parent=5 // pred_region
      %s204 = ssub.s32 %s11, 1
      %s205 = smul.u32 16, %s16
      %p206 = scmp.lt.s32.totalorder %s205, 31
      %s207 = scalar_select %p206, %s205, 31
      %s208 = smul.addr %s207, 8
      %s209 = scalar_lea.vmem %s0, %s208
      %p210 = pneg %p37
      %p211 = pneg %p34
      %s212 = smul.u32 16, %s16
      %p213 = scmp.lt.s32.totalorder %s212, 31
      %s214 = scalar_select %p213, %s212, 31
      %s215 = smul.addr %s214, 8
      %s216 = scalar_lea.vmem %s1, %s215
      %p217 = pneg %p63
      %p218 = pneg %p60
      %p219 = pneg %p84
      %p220 = pneg %p81
      %p221 = pneg %p105
      %p222 = pneg %p102
      %p223 = pneg %p126
      %p224 = pneg %p123
      %p225 = pneg %p152
      %p226 = pneg %p149
      %s227 = smul.u32 16, %s16
      %p228 = scmp.lt.s32.totalorder %s227, 31
      %s229 = scalar_select %p228, %s227, 31
      %s230 = smul.addr %s229, 8
      %s231 = scalar_lea.vmem %s5, %s230
      %s232 = smul.u32 16, %s16
      %p233 = scmp.lt.s32.totalorder %s232, 31
      %s234 = scalar_select %p233, %s232, 31
      %s235 = smul.addr %s234, 8
      %s236 = scalar_lea.vmem %s0, %s235
      %s237 = smul.u32 16, %s16
      %s238 = smul.u32 16, %s16
      %p239 = scmp.lt.s32.totalorder %s238, 31
      %s240 = scalar_select %p239, %s238, 31
      %s241 = smul.addr %s240, 8
      %s242 = scalar_lea.vmem %s1, %s241
      %s243 = smul.u32 16, %s16
      %s244 = smul.u32 16, %s16
      %p245 = scmp.lt.s32.totalorder %s244, 31
      %s246 = scalar_select %p245, %s244, 31
      %s247 = smul.addr %s246, 8
      %s248 = scalar_lea.vmem %s5, %s247
      %s249 = smul.u32 16, %s16
      %v251 = vld [vmem:[%s236] sm:$0xff]
      %v252 = vld [vmem:[%s236 + $0x8] sm:$0xff]
      %v253 = vld [vmem:[%s236 + $0x10] sm:$0xff]
      %v254 = vld [vmem:[%s236 + $0x18] sm:$0xff]
      %v255 = vld [vmem:[%s236 + $0x20] sm:$0xff]
      %v256 = vld [vmem:[%s236 + $0x28] sm:$0xff]
      %v257 = vld [vmem:[%s236 + $0x30] sm:$0xff]
      %v258 = vld [vmem:[%s236 + $0x38] sm:$0xff]
      %v259 = vld [vmem:[%s236 + $0x40] sm:$0xff]
      %v260 = vld [vmem:[%s236 + $0x48] sm:$0xff]
      %v261 = vld [vmem:[%s236 + $0x50] sm:$0xff]
      %v262 = vld [vmem:[%s236 + $0x58] sm:$0xff]
      %v263 = vld [vmem:[%s236 + $0x60] sm:$0xff]
      %v264 = vld [vmem:[%s236 + $0x68] sm:$0xff]
      %v265 = vld [vmem:[%s236 + $0x70] sm:$0xff]
      %v266 = vld [vmem:[%s236 + $0x78] sm:$0xff]
      %v267 = vpack.c.bf16 %v252, %v251
      %v268 = vpack.c.bf16 %v254, %v253
      %v269 = vpack.c.bf16 %v256, %v255
      %v270 = vpack.c.bf16 %v258, %v257
      %v271 = vpack.c.bf16 %v260, %v259
      %v272 = vpack.c.bf16 %v262, %v261
      %v273 = vpack.c.bf16 %v264, %v263
      %v274 = vpack.c.bf16 %v266, %v265
      %v275 = vld [vmem:[%s242] sm:$0xff]
      %v276 = vld [vmem:[%s242 + $0x8] sm:$0xff]
      %v277 = vld [vmem:[%s242 + $0x10] sm:$0xff]
      %v278 = vld [vmem:[%s242 + $0x18] sm:$0xff]
      %v279 = vld [vmem:[%s242 + $0x20] sm:$0xff]
      %v280 = vld [vmem:[%s242 + $0x28] sm:$0xff]
      %v281 = vld [vmem:[%s242 + $0x30] sm:$0xff]
      %v282 = vld [vmem:[%s242 + $0x38] sm:$0xff]
      %v283 = vld [vmem:[%s242 + $0x40] sm:$0xff]
      %v284 = vld [vmem:[%s242 + $0x48] sm:$0xff]
      %v285 = vld [vmem:[%s242 + $0x50] sm:$0xff]
      %v286 = vld [vmem:[%s242 + $0x58] sm:$0xff]
      %v287 = vld [vmem:[%s242 + $0x60] sm:$0xff]
      %v288 = vld [vmem:[%s242 + $0x68] sm:$0xff]
      %v289 = vld [vmem:[%s242 + $0x70] sm:$0xff]
      %v290 = vld [vmem:[%s242 + $0x78] sm:$0xff]
      %v291 = vpack.c.bf16 %v276, %v275
      %v292 = vpack.c.bf16 %v278, %v277
      %v293 = vpack.c.bf16 %v280, %v279
      %v294 = vpack.c.bf16 %v282, %v281
      %v295 = vpack.c.bf16 %v284, %v283
      %v296 = vpack.c.bf16 %v286, %v285
      %v297 = vpack.c.bf16 %v288, %v287
      %v298 = vpack.c.bf16 %v290, %v289
      %v299 = vld [vmem:[%s2] sm:$0xff]
      %v300 = vld [vmem:[%s2 + $0x8] sm:$0xff]
      %v301 = vld [vmem:[%s2 + $0x10] sm:$0xf]
      %v302 = vld [vmem:[%s2 + $0x14] sm:$0xff]
      %v303 = vld [vmem:[%s2 + $0x1c] sm:$0xff]
      %v304 = vld [vmem:[%s2 + $0x24] sm:$0xf]
      %v305 = vld [vmem:[%s2 + $0x28] sm:$0xff]
      %v306 = vld [vmem:[%s2 + $0x30] sm:$0xff]
      %v307 = vld [vmem:[%s2 + $0x38] sm:$0xf]
      %v308 = vld [vmem:[%s2 + $0x3c] sm:$0xff]
      %v309 = vld [vmem:[%s2 + $0x44] sm:$0xff]
      %v310 = vld [vmem:[%s2 + $0x4c] sm:$0xf]
      %v311 = vld [vmem:[%s2 + $0x50] sm:$0x11]
      %v312 = vld [vmem:[%s2 + $0x58] sm:$0x11]
      %v313 = vld [vmem:[%s2 + $0x60] sm:$0x1]
      %v329 = vunpack.c.l.b16 %v299
      %v330 = vunpack.c.h.b16 %v299
      %v331 = vunpack.c.l.b16 %v300
      %v332 = vunpack.c.h.b16 %v300
      %v333 = vunpack.c.l.b16 %v301
      %v334 = vunpack.c.l.b16 %v302
      %v335 = vunpack.c.h.b16 %v302
      %v336 = vunpack.c.l.b16 %v303
      %v337 = vunpack.c.h.b16 %v303
      %v338 = vunpack.c.l.b16 %v304
      %v339 = vunpack.c.l.b16 %v305
      %v340 = vunpack.c.h.b16 %v305
      %v341 = vunpack.c.l.b16 %v306
      %v342 = vunpack.c.h.b16 %v306
      %v343 = vunpack.c.l.b16 %v307
      %v344 = vunpack.c.l.b16 %v308
      %v345 = vunpack.c.h.b16 %v308
      %v346 = vunpack.c.l.b16 %v309
      %v347 = vunpack.c.h.b16 %v309
      %v348 = vunpack.c.l.b16 %v310
      %v349 = vunpack.c.l.b16 %v311
      %v350 = vunpack.c.h.b16 %v311
      %v351 = vunpack.c.l.b16 %v312
      %v352 = vunpack.c.h.b16 %v312
      %v353 = vunpack.c.l.b16 %v313
      %v354 = vpack.c.b16 %v334, %v329
      %v355 = vpack.c.b16 %v335, %v330
      %v356 = vpack.c.b16 %v336, %v331
      %v357 = vpack.c.b16 %v337, %v332
      %v358 = vpack.c.b16 %v338, %v333
      %v359 = vpack.c.b16 %v344, %v339
      %v360 = vpack.c.b16 %v345, %v340
      %v361 = vpack.c.b16 %v346, %v341
      %v362 = vpack.c.b16 %v347, %v342
      %v363 = vpack.c.b16 %v348, %v343
      %v364 = vpack.c.b16 %v349, %v349
      %v365 = vpack.c.b16 %v350, %v350
      %v366 = vpack.c.b16 %v351, %v351
      %v367 = vpack.c.b16 %v352, %v352
      %v368 = vpack.c.b16 %v353, %v353
      %vm379 = vcmask 269312
      %v381 = vsel %vm379, %v267, 0
      %v384 = vsel %vm379, %v268, 0
      %v387 = vsel %vm379, %v269, 0
      %v390 = vsel %vm379, %v270, 0
      %v393 = vsel %vm379, %v271, 0
      %v396 = vsel %vm379, %v272, 0
      %v399 = vsel %vm379, %v273, 0
      %v402 = vsel %vm379, %v274, 0
      %vm404 = vcmask 1040384
      %v405 = vsel 0, 4294967295, 65535
      %v406 = vsel %vm404, %v405, 0
      %v408 = vand.u32 %v364, %v406
      %v411 = vand.u32 %v365, %v406
      %v414 = vand.u32 %v366, %v406
      %v417 = vand.u32 %v367, %v406
      %v420 = vand.u32 %v368, %v406
      %422 = vmatprep.subr.bf16.mxu0 %v355
      %423 = vmatpush1.bf16.msra.mxu0 %v354
      %424 = vmatprep.subr.bf16.mxu0 %v360
      %425 = vmatpush1.bf16.msra.mxu0 %v359
      %426 = vmatprep.subr.bf16.mxu0 %v411
      %427 = vmatpush1.bf16.msra.mxu0 %v408
      %428 = vmatprep.subr.bf16.mxu0 0
      %429 = vmatpush1.bf16.msra.mxu0 0
      %430 = vmatprep.subr.bf16.mxu0 0
      %431 = vmatpush1.bf16.msra.mxu0 0
      %432 = vmatprep.subr.bf16.mxu0 0
      %433 = vmatpush1.bf16.msra.mxu0 0
      %434 = vmatprep.subr.bf16.mxu0 0
      %435 = vmatpush1.bf16.msra.mxu0 0
      %436 = vmatprep.subr.bf16.mxu0 0
      %437 = vmatpush1.bf16.msra.mxu0 0
      %438 = vmatprep.subr.bf16.mxu0 0
      %439 = vmatpush1.bf16.msra.mxu0 0
      %440 = vmatprep.subr.bf16.mxu0 0
      %441 = vmatpush1.bf16.msra.mxu0 0
      %442 = vmatprep.subr.bf16.mxu0 0
      %443 = vmatpush1.bf16.msra.mxu0 0
      %444 = vmatprep.subr.bf16.mxu0 0
      %445 = vmatpush1.bf16.msra.mxu0 0
      %446 = vmatprep.subr.bf16.mxu0 0
      %447 = vmatpush1.bf16.msra.mxu0 0
      %448 = vmatprep.subr.bf16.mxu0 0
      %449 = vmatpush1.bf16.msra.mxu0 0
      %450 = vmatprep.subr.bf16.mxu0 0
      %451 = vmatpush1.bf16.msra.mxu0 0
      %452 = vmatprep.subr.bf16.mxu0 0
      %453 = vmatpush1.bf16.msra.mxu0 0
      %454 = vmatprep.mubr.bf16.mxu0 0
      %455 = vmatmul.mubr.bf16.gmra.mrb[0].mxu0 %v381
      %v456 = vpop.f32.mrb[0].mxu0
      %v457 = vadd.f32 0.0, %v456
      %v458 = vpop.f32.mrb[0].mxu0
      %v459 = vadd.f32 0.0, %v458
      %v460 = vpop.f32.mrb[0].mxu0
      %v461 = vadd.f32 0.0, %v460
      %v462 = vpop.f32.mrb[0].mxu0
      %v463 = vadd.f32 0.0, %v462
      %464 = vmatprep.mubr.bf16.mxu0 0
      %465 = vmatmul.mubr.bf16.gmra.mrb[0].mxu0 %v384
      %v466 = vpop.f32.mrb[0].mxu0
      %v467 = vadd.f32 0.0, %v466
      %v468 = vpop.f32.mrb[0].mxu0
      %v469 = vadd.f32 0.0, %v468
      %v470 = vpop.f32.mrb[0].mxu0
      %v471 = vadd.f32 0.0, %v470
      %v472 = vpop.f32.mrb[0].mxu0
      %v473 = vadd.f32 0.0, %v472
      %474 = vmatprep.mubr.bf16.mxu0 0
      %475 = vmatmul.mubr.bf16.gmra.mrb[0].mxu0 %v387
      %v476 = vpop.f32.mrb[0].mxu0
      %v477 = vadd.f32 0.0, %v476
      %v478 = vpop.f32.mrb[0].mxu0
      %v479 = vadd.f32 0.0, %v478
      %v480 = vpop.f32.mrb[0].mxu0
      %v481 = vadd.f32 0.0, %v480
      %v482 = vpop.f32.mrb[0].mxu0
      %v483 = vadd.f32 0.0, %v482
      %484 = vmatprep.mubr.bf16.mxu0 0
      %485 = vmatmul.mubr.bf16.gmra.mrb[0].mxu0 %v390
      %v486 = vpop.f32.mrb[0].mxu0
      %v487 = vadd.f32 0.0, %v486
      %v488 = vpop.f32.mrb[0].mxu0
      %v489 = vadd.f32 0.0, %v488
      %v490 = vpop.f32.mrb[0].mxu0
      %v491 = vadd.f32 0.0, %v490
      %v492 = vpop.f32.mrb[0].mxu0
      %v493 = vadd.f32 0.0, %v492
      %494 = vmatprep.mubr.bf16.mxu0 0
      %495 = vmatmul.mubr.bf16.gmra.mrb[0].mxu0 %v393
      %v496 = vpop.f32.mrb[0].mxu0
      %v497 = vadd.f32 0.0, %v496
      %v498 = vpop.f32.mrb[0].mxu0
      %v499 = vadd.f32 0.0, %v498
      %v500 = vpop.f32.mrb[0].mxu0
      %v501 = vadd.f32 0.0, %v500
      %v502 = vpop.f32.mrb[0].mxu0
      %v503 = vadd.f32 0.0, %v502
      %504 = vmatprep.mubr.bf16.mxu0 0
      %505 = vmatmul.mubr.bf16.gmra.mrb[0].mxu0 %v396
      %v506 = vpop.f32.mrb[0].mxu0
      %v507 = vadd.f32 0.0, %v506
      %v508 = vpop.f32.mrb[0].mxu0
      %v509 = vadd.f32 0.0, %v508
      %v510 = vpop.f32.mrb[0].mxu0
      %v511 = vadd.f32 0.0, %v510
      %v512 = vpop.f32.mrb[0].mxu0
      %v513 = vadd.f32 0.0, %v512
      %514 = vmatprep.mubr.bf16.mxu0 0
      %515 = vmatmul.mubr.bf16.gmra.mrb[0].mxu0 %v399
      %v516 = vpop.f32.mrb[0].mxu0
      %v517 = vadd.f32 0.0, %v516
      %v518 = vpop.f32.mrb[0].mxu0
      %v519 = vadd.f32 0.0, %v518
      %v520 = vpop.f32.mrb[0].mxu0
      %v521 = vadd.f32 0.0, %v520
      %v522 = vpop.f32.mrb[0].mxu0
      %v523 = vadd.f32 0.0, %v522
      %524 = vmatprep.mubr.bf16.mxu0 0
      %525 = vmatmul.mubr.bf16.gmra.mrb[0].mxu0 %v402
      %v526 = vpop.f32.mrb[0].mxu0
      %v527 = vadd.f32 0.0, %v526
      %v528 = vpop.f32.mrb[0].mxu0
      %v529 = vadd.f32 0.0, %v528
      %v530 = vpop.f32.mrb[0].mxu0
      %v531 = vadd.f32 0.0, %v530
      %v532 = vpop.f32.mrb[0].mxu0
      %v533 = vadd.f32 0.0, %v532
      %534 = vdwg.mxu0
      %535 = vmatprep.subr.bf16.mxu0 %v357
      %536 = vmatpush1.bf16.msra.mxu0 %v356
      %537 = vmatprep.subr.bf16.mxu0 %v362
      %538 = vmatpush1.bf16.msra.mxu0 %v361
      %539 = vmatprep.subr.bf16.mxu0 %v417
      %540 = vmatpush1.bf16.msra.mxu0 %v414
      %541 = vmatprep.subr.bf16.mxu0 0
      %542 = vmatpush1.bf16.msra.mxu0 0
      %543 = vmatprep.subr.bf16.mxu0 0
      %544 = vmatpush1.bf16.msra.mxu0 0
      %545 = vmatprep.subr.bf16.mxu0 0
      %546 = vmatpush1.bf16.msra.mxu0 0
      %547 = vmatprep.subr.bf16.mxu0 0
      %548 = vmatpush1.bf16.msra.mxu0 0
      %549 = vmatprep.subr.bf16.mxu0 0
      %550 = vmatpush1.bf16.msra.mxu0 0
      %551 = vmatprep.subr.bf16.mxu0 0
      %552 = vmatpush1.bf16.msra.mxu0 0
      %553 = vmatprep.subr.bf16.mxu0 0
      %554 = vmatpush1.bf16.msra.mxu0 0
      %555 = vmatprep.subr.bf16.mxu0 0
      %556 = vmatpush1.bf16.msra.mxu0 0
      %557 = vmatprep.subr.bf16.mxu0 0
      %558 = vmatpush1.bf16.msra.mxu0 0
      %559 = vmatprep.subr.bf16.mxu0 0
      %560 = vmatpush1.bf16.msra.mxu0 0
      %561 = vmatprep.subr.bf16.mxu0 0
      %562 = vmatpush1.bf16.msra.mxu0 0
      %563 = vmatprep.subr.bf16.mxu0 0
      %564 = vmatpush1.bf16.msra.mxu0 0
      %565 = vmatprep.subr.bf16.mxu0 0
      %566 = vmatpush1.bf16.msra.mxu0 0
      %567 = vmatprep.mubr.bf16.mxu0 0
      %568 = vmatmul.mubr.bf16.gmra.mrb[0].mxu0 %v381
      %v569 = vpop.f32.mrb[0].mxu0
      %v570 = vadd.f32 0.0, %v569
      %v571 = vpop.f32.mrb[0].mxu0
      %v572 = vadd.f32 0.0, %v571
      %v573 = vpop.f32.mrb[0].mxu0
      %v574 = vadd.f32 0.0, %v573
      %v575 = vpop.f32.mrb[0].mxu0
      %v576 = vadd.f32 0.0, %v575
      %577 = vmatprep.mubr.bf16.mxu0 0
      %578 = vmatmul.mubr.bf16.gmra.mrb[0].mxu0 %v384
      %v579 = vpop.f32.mrb[0].mxu0
      %v580 = vadd.f32 0.0, %v579
      %v581 = vpop.f32.mrb[0].mxu0
      %v582 = vadd.f32 0.0, %v581
      %v583 = vpop.f32.mrb[0].mxu0
      %v584 = vadd.f32 0.0, %v583
      %v585 = vpop.f32.mrb[0].mxu0
      %v586 = vadd.f32 0.0, %v585
      %587 = vmatprep.mubr.bf16.mxu0 0
      %588 = vmatmul.mubr.bf16.gmra.mrb[0].mxu0 %v387
      %v589 = vpop.f32.mrb[0].mxu0
      %v590 = vadd.f32 0.0, %v589
      %v591 = vpop.f32.mrb[0].mxu0
      %v592 = vadd.f32 0.0, %v591
      %v593 = vpop.f32.mrb[0].mxu0
      %v594 = vadd.f32 0.0, %v593
      %v595 = vpop.f32.mrb[0].mxu0
      %v596 = vadd.f32 0.0, %v595
      %597 = vmatprep.mubr.bf16.mxu0 0
      %598 = vmatmul.mubr.bf16.gmra.mrb[0].mxu0 %v390
      %v599 = vpop.f32.mrb[0].mxu0
      %v600 = vadd.f32 0.0, %v599
      %v601 = vpop.f32.mrb[0].mxu0
      %v602 = vadd.f32 0.0, %v601
      %v603 = vpop.f32.mrb[0].mxu0
      %v604 = vadd.f32 0.0, %v603
      %v605 = vpop.f32.mrb[0].mxu0
      %v606 = vadd.f32 0.0, %v605
      %607 = vmatprep.mubr.bf16.mxu0 0
      %608 = vmatmul.mubr.bf16.gmra.mrb[0].mxu0 %v393
      %v609 = vpop.f32.mrb[0].mxu0
      %v610 = vadd.f32 0.0, %v609
      %v611 = vpop.f32.mrb[0].mxu0
      %v612 = vadd.f32 0.0, %v611
      %v613 = vpop.f32.mrb[0].mxu0
      %v614 = vadd.f32 0.0, %v613
      %v615 = vpop.f32.mrb[0].mxu0
      %v616 = vadd.f32 0.0, %v615
      %617 = vmatprep.mubr.bf16.mxu0 0
      %618 = vmatmul.mubr.bf16.gmra.mrb[0].mxu0 %v396
      %v619 = vpop.f32.mrb[0].mxu0
      %v620 = vadd.f32 0.0, %v619
      %v621 = vpop.f32.mrb[0].mxu0
      %v622 = vadd.f32 0.0, %v621
      %v623 = vpop.f32.mrb[0].mxu0
      %v624 = vadd.f32 0.0, %v623
      %v625 = vpop.f32.mrb[0].mxu0
      %v626 = vadd.f32 0.0, %v625
      %627 = vmatprep.mubr.bf16.mxu0 0
      %628 = vmatmul.mubr.bf16.gmra.mrb[0].mxu0 %v399
      %v629 = vpop.f32.mrb[0].mxu0
      %v630 = vadd.f32 0.0, %v629
      %v631 = vpop.f32.mrb[0].mxu0
      %v632 = vadd.f32 0.0, %v631
      %v633 = vpop.f32.mrb[0].mxu0
      %v634 = vadd.f32 0.0, %v633
      %v635 = vpop.f32.mrb[0].mxu0
      %v636 = vadd.f32 0.0, %v635
      %637 = vmatprep.mubr.bf16.mxu0 0
      %638 = vmatmul.mubr.bf16.gmra.mrb[0].mxu0 %v402
      %v639 = vpop.f32.mrb[0].mxu0
      %v640 = vadd.f32 0.0, %v639
      %v641 = vpop.f32.mrb[0].mxu0
      %v642 = vadd.f32 0.0, %v641
      %v643 = vpop.f32.mrb[0].mxu0
      %v644 = vadd.f32 0.0, %v643
      %v645 = vpop.f32.mrb[0].mxu0
      %v646 = vadd.f32 0.0, %v645
      %647 = vdwg.mxu0
      %648 = vmatprep.subr.bf16.mxu0 0
      %649 = vmatpush1.bf16.msra.mxu0 %v358
      %650 = vmatprep.subr.bf16.mxu0 0
      %651 = vmatpush1.bf16.msra.mxu0 %v363
      %652 = vmatprep.subr.bf16.mxu0 0
      %653 = vmatpush1.bf16.msra.mxu0 %v420
      %654 = vmatprep.subr.bf16.mxu0 0
      %655 = vmatpush1.bf16.msra.mxu0 0
      %656 = vmatprep.subr.bf16.mxu0 0
      %657 = vmatpush1.bf16.msra.mxu0 0
      %658 = vmatprep.subr.bf16.mxu0 0
      %659 = vmatpush1.bf16.msra.mxu0 0
      %660 = vmatprep.subr.bf16.mxu0 0
      %661 = vmatpush1.bf16.msra.mxu0 0
      %662 = vmatprep.subr.bf16.mxu0 0
      %663 = vmatpush1.bf16.msra.mxu0 0
      %664 = vmatprep.subr.bf16.mxu0 0
      %665 = vmatpush1.bf16.msra.mxu0 0
      %666 = vmatprep.subr.bf16.mxu0 0
      %667 = vmatpush1.bf16.msra.mxu0 0
      %668 = vmatprep.subr.bf16.mxu0 0
      %669 = vmatpush1.bf16.msra.mxu0 0
      %670 = vmatprep.subr.bf16.mxu0 0
      %671 = vmatpush1.bf16.msra.mxu0 0
      %672 = vmatprep.subr.bf16.mxu0 0
      %673 = vmatpush1.bf16.msra.mxu0 0
      %674 = vmatprep.subr.bf16.mxu0 0
      %675 = vmatpush1.bf16.msra.mxu0 0
      %676 = vmatprep.subr.bf16.mxu0 0
      %677 = vmatpush1.bf16.msra.mxu0 0
      %678 = vmatprep.subr.bf16.mxu0 0
      %679 = vmatpush1.bf16.msra.mxu0 0
      %680 = vmatprep.mubr.bf16.mxu0 0
      %681 = vmatmul.mubr.bf16.gmra.mrb[0].mxu0 %v381
      %v682 = vpop.f32.mrb[0].mxu0
      %v683 = vadd.f32 0.0, %v682
      %v684 = vpop.f32.mrb[0].mxu0
      %v685 = vpop.f32.mrb[0].mxu0
      %v686 = vadd.f32 0.0, %v685
      %v687 = vpop.f32.mrb[0].mxu0
      %688 = vmatprep.mubr.bf16.mxu0 0
      %689 = vmatmul.mubr.bf16.gmra.mrb[0].mxu0 %v384
      %v690 = vpop.f32.mrb[0].mxu0
      %v691 = vadd.f32 0.0, %v690
      %v692 = vpop.f32.mrb[0].mxu0
      %v693 = vpop.f32.mrb[0].mxu0
      %v694 = vadd.f32 0.0, %v693
      %v695 = vpop.f32.mrb[0].mxu0
      %696 = vmatprep.mubr.bf16.mxu0 0
      %697 = vmatmul.mubr.bf16.gmra.mrb[0].mxu0 %v387
      %v698 = vpop.f32.mrb[0].mxu0
      %v699 = vadd.f32 0.0, %v698
      %v700 = vpop.f32.mrb[0].mxu0
      %v701 = vpop.f32.mrb[0].mxu0
      %v702 = vadd.f32 0.0, %v701
      %v703 = vpop.f32.mrb[0].mxu0
      %704 = vmatprep.mubr.bf16.mxu0 0
      %705 = vmatmul.mubr.bf16.gmra.mrb[0].mxu0 %v390
      %v706 = vpop.f32.mrb[0].mxu0
      %v707 = vadd.f32 0.0, %v706
      %v708 = vpop.f32.mrb[0].mxu0
      %v709 = vpop.f32.mrb[0].mxu0
      %v710 = vadd.f32 0.0, %v709
      %v711 = vpop.f32.mrb[0].mxu0
      %712 = vmatprep.mubr.bf16.mxu0 0
      %713 = vmatmul.mubr.bf16.gmra.mrb[0].mxu0 %v393
      %v714 = vpop.f32.mrb[0].mxu0
      %v715 = vadd.f32 0.0, %v714
      %v716 = vpop.f32.mrb[0].mxu0
      %v717 = vpop.f32.mrb[0].mxu0
      %v718 = vadd.f32 0.0, %v717
      %v719 = vpop.f32.mrb[0].mxu0
      %720 = vmatprep.mubr.bf16.mxu0 0
      %721 = vmatmul.mubr.bf16.gmra.mrb[0].mxu0 %v396
      %v722 = vpop.f32.mrb[0].mxu0
      %v723 = vadd.f32 0.0, %v722
      %v724 = vpop.f32.mrb[0].mxu0
      %v725 = vpop.f32.mrb[0].mxu0
      %v726 = vadd.f32 0.0, %v725
      %v727 = vpop.f32.mrb[0].mxu0
      %728 = vmatprep.mubr.bf16.mxu0 0
      %729 = vmatmul.mubr.bf16.gmra.mrb[0].mxu0 %v399
      %v730 = vpop.f32.mrb[0].mxu0
      %v731 = vadd.f32 0.0, %v730
      %v732 = vpop.f32.mrb[0].mxu0
      %v733 = vpop.f32.mrb[0].mxu0
      %v734 = vadd.f32 0.0, %v733
      %v735 = vpop.f32.mrb[0].mxu0
      %736 = vmatprep.mubr.bf16.mxu0 0
      %737 = vmatmul.mubr.bf16.gmra.mrb[0].mxu0 %v402
      %v738 = vpop.f32.mrb[0].mxu0
      %v739 = vadd.f32 0.0, %v738
      %v740 = vpop.f32.mrb[0].mxu0
      %v741 = vpop.f32.mrb[0].mxu0
      %v742 = vadd.f32 0.0, %v741
      %v743 = vpop.f32.mrb[0].mxu0
      %744 = vdwg.mxu0
      %v745 = vld [vmem:[%s3] sm:$0xff]
      %v746 = vld [vmem:[%s3 + $0x8] sm:$0xff]
      %v747 = vld [vmem:[%s3 + $0x10] sm:$0xf]
      %v748 = vld [vmem:[%s3 + $0x14] sm:$0xff]
      %v749 = vld [vmem:[%s3 + $0x1c] sm:$0xff]
      %v750 = vld [vmem:[%s3 + $0x24] sm:$0xf]
      %v751 = vld [vmem:[%s3 + $0x28] sm:$0xff]
      %v752 = vld [vmem:[%s3 + $0x30] sm:$0xff]
      %v753 = vld [vmem:[%s3 + $0x38] sm:$0xf]
      %v754 = vld [vmem:[%s3 + $0x3c] sm:$0xff]
      %v755 = vld [vmem:[%s3 + $0x44] sm:$0xff]
      %v756 = vld [vmem:[%s3 + $0x4c] sm:$0xf]
      %v757 = vld [vmem:[%s3 + $0x50] sm:$0x11]
      %v758 = vld [vmem:[%s3 + $0x58] sm:$0x11]
      %v759 = vld [vmem:[%s3 + $0x60] sm:$0x1]
      %v775 = vunpack.c.l.b16 %v745
      %v776 = vunpack.c.h.b16 %v745
      %v777 = vunpack.c.l.b16 %v746
      %v778 = vunpack.c.h.b16 %v746
      %v779 = vunpack.c.l.b16 %v747
      %v780 = vunpack.c.l.b16 %v748
      %v781 = vunpack.c.h.b16 %v748
      %v782 = vunpack.c.l.b16 %v749
      %v783 = vunpack.c.h.b16 %v749
      %v784 = vunpack.c.l.b16 %v750
      %v785 = vunpack.c.l.b16 %v751
      %v786 = vunpack.c.h.b16 %v751
      %v787 = vunpack.c.l.b16 %v752
      %v788 = vunpack.c.h.b16 %v752
      %v789 = vunpack.c.l.b16 %v753
      %v790 = vunpack.c.l.b16 %v754
      %v791 = vunpack.c.h.b16 %v754
      %v792 = vunpack.c.l.b16 %v755
      %v793 = vunpack.c.h.b16 %v755
      %v794 = vunpack.c.l.b16 %v756
      %v795 = vunpack.c.l.b16 %v757
      %v796 = vunpack.c.h.b16 %v757
      %v797 = vunpack.c.l.b16 %v758
      %v798 = vunpack.c.h.b16 %v758
      %v799 = vunpack.c.l.b16 %v759
      %v800 = vpack.c.b16 %v780, %v775
      %v801 = vpack.c.b16 %v781, %v776
      %v802 = vpack.c.b16 %v782, %v777
      %v803 = vpack.c.b16 %v783, %v778
      %v804 = vpack.c.b16 %v784, %v779
      %v805 = vpack.c.b16 %v790, %v785
      %v806 = vpack.c.b16 %v791, %v786
      %v807 = vpack.c.b16 %v792, %v787
      %v808 = vpack.c.b16 %v793, %v788
      %v809 = vpack.c.b16 %v794, %v789
      %v810 = vpack.c.b16 %v795, %v795
      %v811 = vpack.c.b16 %v796, %v796
      %v812 = vpack.c.b16 %v797, %v797
      %v813 = vpack.c.b16 %v798, %v798
      %v814 = vpack.c.b16 %v799, %v799
      %v826 = vsel %vm379, %v291, 0
      %v829 = vsel %vm379, %v292, 0
      %v832 = vsel %vm379, %v293, 0
      %v835 = vsel %vm379, %v294, 0
      %v838 = vsel %vm379, %v295, 0
      %v841 = vsel %vm379, %v296, 0
      %v844 = vsel %vm379, %v297, 0
      %v847 = vsel %vm379, %v298, 0
      %v850 = vand.u32 %v810, %v406
      %v853 = vand.u32 %v811, %v406
      %v856 = vand.u32 %v812, %v406
      %v859 = vand.u32 %v813, %v406
      %v862 = vand.u32 %v814, %v406
      %864 = vmatprep.subr.bf16.mxu0 %v801
      %865 = vmatpush1.bf16.msra.mxu0 %v800
      %866 = vmatprep.subr.bf16.mxu0 %v806
      %867 = vmatpush1.bf16.msra.mxu0 %v805
      %868 = vmatprep.subr.bf16.mxu0 %v853
      %869 = vmatpush1.bf16.msra.mxu0 %v850
      %870 = vmatprep.subr.bf16.mxu0 0
      %871 = vmatpush1.bf16.msra.mxu0 0
      %872 = vmatprep.subr.bf16.mxu0 0
      %873 = vmatpush1.bf16.msra.mxu0 0
      %874 = vmatprep.subr.bf16.mxu0 0
      %875 = vmatpush1.bf16.msra.mxu0 0
      %876 = vmatprep.subr.bf16.mxu0 0
      %877 = vmatpush1.bf16.msra.mxu0 0
      %878 = vmatprep.subr.bf16.mxu0 0
      %879 = vmatpush1.bf16.msra.mxu0 0
      %880 = vmatprep.subr.bf16.mxu0 0
      %881 = vmatpush1.bf16.msra.mxu0 0
      %882 = vmatprep.subr.bf16.mxu0 0
      %883 = vmatpush1.bf16.msra.mxu0 0
      %884 = vmatprep.subr.bf16.mxu0 0
      %885 = vmatpush1.bf16.msra.mxu0 0
      %886 = vmatprep.subr.bf16.mxu0 0
      %887 = vmatpush1.bf16.msra.mxu0 0
      %888 = vmatprep.subr.bf16.mxu0 0
      %889 = vmatpush1.bf16.msra.mxu0 0
      %890 = vmatprep.subr.bf16.mxu0 0
      %891 = vmatpush1.bf16.msra.mxu0 0
      %892 = vmatprep.subr.bf16.mxu0 0
      %893 = vmatpush1.bf16.msra.mxu0 0
      %894 = vmatprep.subr.bf16.mxu0 0
      %895 = vmatpush1.bf16.msra.mxu0 0
      %896 = vmatprep.mubr.bf16.mxu0 0
      %897 = vmatmul.mubr.bf16.gmra.mrb[0].mxu0 %v826
      %v898 = vpop.f32.mrb[0].mxu0
      %v899 = vadd.f32 0.0, %v898
      %v900 = vpop.f32.mrb[0].mxu0
      %v901 = vadd.f32 0.0, %v900
      %v902 = vpop.f32.mrb[0].mxu0
      %v903 = vadd.f32 0.0, %v902
      %v904 = vpop.f32.mrb[0].mxu0
      %v905 = vadd.f32 0.0, %v904
      %906 = vmatprep.mubr.bf16.mxu0 0
      %907 = vmatmul.mubr.bf16.gmra.mrb[0].mxu0 %v829
      %v908 = vpop.f32.mrb[0].mxu0
      %v909 = vadd.f32 0.0, %v908
      %v910 = vpop.f32.mrb[0].mxu0
      %v911 = vadd.f32 0.0, %v910
      %v912 = vpop.f32.mrb[0].mxu0
      %v913 = vadd.f32 0.0, %v912
      %v914 = vpop.f32.mrb[0].mxu0
      %v915 = vadd.f32 0.0, %v914
      %916 = vmatprep.mubr.bf16.mxu0 0
      %917 = vmatmul.mubr.bf16.gmra.mrb[0].mxu0 %v832
      %v918 = vpop.f32.mrb[0].mxu0
      %v919 = vadd.f32 0.0, %v918
      %v920 = vpop.f32.mrb[0].mxu0
      %v921 = vadd.f32 0.0, %v920
      %v922 = vpop.f32.mrb[0].mxu0
      %v923 = vadd.f32 0.0, %v922
      %v924 = vpop.f32.mrb[0].mxu0
      %v925 = vadd.f32 0.0, %v924
      %926 = vmatprep.mubr.bf16.mxu0 0
      %927 = vmatmul.mubr.bf16.gmra.mrb[0].mxu0 %v835
      %v928 = vpop.f32.mrb[0].mxu0
      %v929 = vadd.f32 0.0, %v928
      %v930 = vpop.f32.mrb[0].mxu0
      %v931 = vadd.f32 0.0, %v930
      %v932 = vpop.f32.mrb[0].mxu0
      %v933 = vadd.f32 0.0, %v932
      %v934 = vpop.f32.mrb[0].mxu0
      %v935 = vadd.f32 0.0, %v934
      %936 = vmatprep.mubr.bf16.mxu0 0
      %937 = vmatmul.mubr.bf16.gmra.mrb[0].mxu0 %v838
      %v938 = vpop.f32.mrb[0].mxu0
      %v939 = vadd.f32 0.0, %v938
      %v940 = vpop.f32.mrb[0].mxu0
      %v941 = vadd.f32 0.0, %v940
      %v942 = vpop.f32.mrb[0].mxu0
      %v943 = vadd.f32 0.0, %v942
      %v944 = vpop.f32.mrb[0].mxu0
      %v945 = vadd.f32 0.0, %v944
      %946 = vmatprep.mubr.bf16.mxu0 0
      %947 = vmatmul.mubr.bf16.gmra.mrb[0].mxu0 %v841
      %v948 = vpop.f32.mrb[0].mxu0
      %v949 = vadd.f32 0.0, %v948
      %v950 = vpop.f32.mrb[0].mxu0
      %v951 = vadd.f32 0.0, %v950
      %v952 = vpop.f32.mrb[0].mxu0
      %v953 = vadd.f32 0.0, %v952
      %v954 = vpop.f32.mrb[0].mxu0
      %v955 = vadd.f32 0.0, %v954
      %956 = vmatprep.mubr.bf16.mxu0 0
      %957 = vmatmul.mubr.bf16.gmra.mrb[0].mxu0 %v844
      %v958 = vpop.f32.mrb[0].mxu0
      %v959 = vadd.f32 0.0, %v958
      %v960 = vpop.f32.mrb[0].mxu0
      %v961 = vadd.f32 0.0, %v960
      %v962 = vpop.f32.mrb[0].mxu0
      %v963 = vadd.f32 0.0, %v962
      %v964 = vpop.f32.mrb[0].mxu0
      %v965 = vadd.f32 0.0, %v964
      %966 = vmatprep.mubr.bf16.mxu0 0
      %967 = vmatmul.mubr.bf16.gmra.mrb[0].mxu0 %v847
      %v968 = vpop.f32.mrb[0].mxu0
      %v969 = vadd.f32 0.0, %v968
      %v970 = vpop.f32.mrb[0].mxu0
      %v971 = vadd.f32 0.0, %v970
      %v972 = vpop.f32.mrb[0].mxu0
      %v973 = vadd.f32 0.0, %v972
      %v974 = vpop.f32.mrb[0].mxu0
      %v975 = vadd.f32 0.0, %v974
      %976 = vdwg.mxu0
      %977 = vmatprep.subr.bf16.mxu0 %v803
      %978 = vmatpush1.bf16.msra.mxu0 %v802
      %979 = vmatprep.subr.bf16.mxu0 %v808
      %980 = vmatpush1.bf16.msra.mxu0 %v807
      %981 = vmatprep.subr.bf16.mxu0 %v859
      %982 = vmatpush1.bf16.msra.mxu0 %v856
      %983 = vmatprep.subr.bf16.mxu0 0
      %984 = vmatpush1.bf16.msra.mxu0 0
      %985 = vmatprep.subr.bf16.mxu0 0
      %986 = vmatpush1.bf16.msra.mxu0 0
      %987 = vmatprep.subr.bf16.mxu0 0
      %988 = vmatpush1.bf16.msra.mxu0 0
      %989 = vmatprep.subr.bf16.mxu0 0
      %990 = vmatpush1.bf16.msra.mxu0 0
      %991 = vmatprep.subr.bf16.mxu0 0
      %992 = vmatpush1.bf16.msra.mxu0 0
      %993 = vmatprep.subr.bf16.mxu0 0
      %994 = vmatpush1.bf16.msra.mxu0 0
      %995 = vmatprep.subr.bf16.mxu0 0
      %996 = vmatpush1.bf16.msra.mxu0 0
      %997 = vmatprep.subr.bf16.mxu0 0
      %998 = vmatpush1.bf16.msra.mxu0 0
      %999 = vmatprep.subr.bf16.mxu0 0
      %1000 = vmatpush1.bf16.msra.mxu0 0
      %1001 = vmatprep.subr.bf16.mxu0 0
      %1002 = vmatpush1.bf16.msra.mxu0 0
      %1003 = vmatprep.subr.bf16.mxu0 0
      %1004 = vmatpush1.bf16.msra.mxu0 0
      %1005 = vmatprep.subr.bf16.mxu0 0
      %1006 = vmatpush1.bf16.msra.mxu0 0
      %1007 = vmatprep.subr.bf16.mxu0 0
      %1008 = vmatpush1.bf16.msra.mxu0 0
      %1009 = vmatprep.mubr.bf16.mxu0 0
      %1010 = vmatmul.mubr.bf16.gmra.mrb[0].mxu0 %v826
      %v1011 = vpop.f32.mrb[0].mxu0
      %v1012 = vadd.f32 0.0, %v1011
      %v1013 = vpop.f32.mrb[0].mxu0
      %v1014 = vadd.f32 0.0, %v1013
      %v1015 = vpop.f32.mrb[0].mxu0
      %v1016 = vadd.f32 0.0, %v1015
      %v1017 = vpop.f32.mrb[0].mxu0
      %v1018 = vadd.f32 0.0, %v1017
      %1019 = vmatprep.mubr.bf16.mxu0 0
      %1020 = vmatmul.mubr.bf16.gmra.mrb[0].mxu0 %v829
      %v1021 = vpop.f32.mrb[0].mxu0
      %v1022 = vadd.f32 0.0, %v1021
      %v1023 = vpop.f32.mrb[0].mxu0
      %v1024 = vadd.f32 0.0, %v1023
      %v1025 = vpop.f32.mrb[0].mxu0
      %v1026 = vadd.f32 0.0, %v1025
      %v1027 = vpop.f32.mrb[0].mxu0
      %v1028 = vadd.f32 0.0, %v1027
      %1029 = vmatprep.mubr.bf16.mxu0 0
      %1030 = vmatmul.mubr.bf16.gmra.mrb[0].mxu0 %v832
      %v1031 = vpop.f32.mrb[0].mxu0
      %v1032 = vadd.f32 0.0, %v1031
      %v1033 = vpop.f32.mrb[0].mxu0
      %v1034 = vadd.f32 0.0, %v1033
      %v1035 = vpop.f32.mrb[0].mxu0
      %v1036 = vadd.f32 0.0, %v1035
      %v1037 = vpop.f32.mrb[0].mxu0
      %v1038 = vadd.f32 0.0, %v1037
      %1039 = vmatprep.mubr.bf16.mxu0 0
      %1040 = vmatmul.mubr.bf16.gmra.mrb[0].mxu0 %v835
      %v1041 = vpop.f32.mrb[0].mxu0
      %v1042 = vadd.f32 0.0, %v1041
      %v1043 = vpop.f32.mrb[0].mxu0
      %v1044 = vadd.f32 0.0, %v1043
      %v1045 = vpop.f32.mrb[0].mxu0
      %v1046 = vadd.f32 0.0, %v1045
      %v1047 = vpop.f32.mrb[0].mxu0
      %v1048 = vadd.f32 0.0, %v1047
      %1049 = vmatprep.mubr.bf16.mxu0 0
      %1050 = vmatmul.mubr.bf16.gmra.mrb[0].mxu0 %v838
      %v1051 = vpop.f32.mrb[0].mxu0
      %v1052 = vadd.f32 0.0, %v1051
      %v1053 = vpop.f32.mrb[0].mxu0
      %v1054 = vadd.f32 0.0, %v1053
      %v1055 = vpop.f32.mrb[0].mxu0
      %v1056 = vadd.f32 0.0, %v1055
      %v1057 = vpop.f32.mrb[0].mxu0
      %v1058 = vadd.f32 0.0, %v1057
      %1059 = vmatprep.mubr.bf16.mxu0 0
      %1060 = vmatmul.mubr.bf16.gmra.mrb[0].mxu0 %v841
      %v1061 = vpop.f32.mrb[0].mxu0
      %v1062 = vadd.f32 0.0, %v1061
      %v1063 = vpop.f32.mrb[0].mxu0
      %v1064 = vadd.f32 0.0, %v1063
      %v1065 = vpop.f32.mrb[0].mxu0
      %v1066 = vadd.f32 0.0, %v1065
      %v1067 = vpop.f32.mrb[0].mxu0
      %v1068 = vadd.f32 0.0, %v1067
      %1069 = vmatprep.mubr.bf16.mxu0 0
      %1070 = vmatmul.mubr.bf16.gmra.mrb[0].mxu0 %v844
      %v1071 = vpop.f32.mrb[0].mxu0
      %v1072 = vadd.f32 0.0, %v1071
      %v1073 = vpop.f32.mrb[0].mxu0
      %v1074 = vadd.f32 0.0, %v1073
      %v1075 = vpop.f32.mrb[0].mxu0
      %v1076 = vadd.f32 0.0, %v1075
      %v1077 = vpop.f32.mrb[0].mxu0
      %v1078 = vadd.f32 0.0, %v1077
      %1079 = vmatprep.mubr.bf16.mxu0 0
      %1080 = vmatmul.mubr.bf16.gmra.mrb[0].mxu0 %v847
      %v1081 = vpop.f32.mrb[0].mxu0
      %v1082 = vadd.f32 0.0, %v1081
      %v1083 = vpop.f32.mrb[0].mxu0
      %v1084 = vadd.f32 0.0, %v1083
      %v1085 = vpop.f32.mrb[0].mxu0
      %v1086 = vadd.f32 0.0, %v1085
      %v1087 = vpop.f32.mrb[0].mxu0
      %v1088 = vadd.f32 0.0, %v1087
      %1089 = vdwg.mxu0
      %1090 = vmatprep.subr.bf16.mxu0 0
      %1091 = vmatpush1.bf16.msra.mxu0 %v804
      %1092 = vmatprep.subr.bf16.mxu0 0
      %1093 = vmatpush1.bf16.msra.mxu0 %v809
      %1094 = vmatprep.subr.bf16.mxu0 0
      %1095 = vmatpush1.bf16.msra.mxu0 %v862
      %1096 = vmatprep.subr.bf16.mxu0 0
      %1097 = vmatpush1.bf16.msra.mxu0 0
      %1098 = vmatprep.subr.bf16.mxu0 0
      %1099 = vmatpush1.bf16.msra.mxu0 0
      %1100 = vmatprep.subr.bf16.mxu0 0
      %1101 = vmatpush1.bf16.msra.mxu0 0
      %1102 = vmatprep.subr.bf16.mxu0 0
      %1103 = vmatpush1.bf16.msra.mxu0 0
      %1104 = vmatprep.subr.bf16.mxu0 0
      %1105 = vmatpush1.bf16.msra.mxu0 0
      %1106 = vmatprep.subr.bf16.mxu0 0
      %1107 = vmatpush1.bf16.msra.mxu0 0
      %1108 = vmatprep.subr.bf16.mxu0 0
      %1109 = vmatpush1.bf16.msra.mxu0 0
      %1110 = vmatprep.subr.bf16.mxu0 0
      %1111 = vmatpush1.bf16.msra.mxu0 0
      %1112 = vmatprep.subr.bf16.mxu0 0
      %1113 = vmatpush1.bf16.msra.mxu0 0
      %1114 = vmatprep.subr.bf16.mxu0 0
      %1115 = vmatpush1.bf16.msra.mxu0 0
      %1116 = vmatprep.subr.bf16.mxu0 0
      %1117 = vmatpush1.bf16.msra.mxu0 0
      %1118 = vmatprep.subr.bf16.mxu0 0
      %1119 = vmatpush1.bf16.msra.mxu0 0
      %1120 = vmatprep.subr.bf16.mxu0 0
      %1121 = vmatpush1.bf16.msra.mxu0 0
      %1122 = vmatprep.mubr.bf16.mxu0 0
      %1123 = vmatmul.mubr.bf16.gmra.mrb[0].mxu0 %v826
      %v1124 = vpop.f32.mrb[0].mxu0
      %v1125 = vadd.f32 0.0, %v1124
      %v1126 = vpop.f32.mrb[0].mxu0
      %v1127 = vpop.f32.mrb[0].mxu0
      %v1128 = vadd.f32 0.0, %v1127
      %v1129 = vpop.f32.mrb[0].mxu0
      %1130 = vmatprep.mubr.bf16.mxu0 0
      %1131 = vmatmul.mubr.bf16.gmra.mrb[0].mxu0 %v829
      %v1132 = vpop.f32.mrb[0].mxu0
      %v1133 = vadd.f32 0.0, %v1132
      %v1134 = vpop.f32.mrb[0].mxu0
      %v1135 = vpop.f32.mrb[0].mxu0
      %v1136 = vadd.f32 0.0, %v1135
      %v1137 = vpop.f32.mrb[0].mxu0
      %1138 = vmatprep.mubr.bf16.mxu0 0
      %1139 = vmatmul.mubr.bf16.gmra.mrb[0].mxu0 %v832
      %v1140 = vpop.f32.mrb[0].mxu0
      %v1141 = vadd.f32 0.0, %v1140
      %v1142 = vpop.f32.mrb[0].mxu0
      %v1143 = vpop.f32.mrb[0].mxu0
      %v1144 = vadd.f32 0.0, %v1143
      %v1145 = vpop.f32.mrb[0].mxu0
      %1146 = vmatprep.mubr.bf16.mxu0 0
      %1147 = vmatmul.mubr.bf16.gmra.mrb[0].mxu0 %v835
      %v1148 = vpop.f32.mrb[0].mxu0
      %v1149 = vadd.f32 0.0, %v1148
      %v1150 = vpop.f32.mrb[0].mxu0
      %v1151 = vpop.f32.mrb[0].mxu0
      %v1152 = vadd.f32 0.0, %v1151
      %v1153 = vpop.f32.mrb[0].mxu0
      %1154 = vmatprep.mubr.bf16.mxu0 0
      %1155 = vmatmul.mubr.bf16.gmra.mrb[0].mxu0 %v838
      %v1156 = vpop.f32.mrb[0].mxu0
      %v1157 = vadd.f32 0.0, %v1156
      %v1158 = vpop.f32.mrb[0].mxu0
      %v1159 = vpop.f32.mrb[0].mxu0
      %v1160 = vadd.f32 0.0, %v1159
      %v1161 = vpop.f32.mrb[0].mxu0
      %1162 = vmatprep.mubr.bf16.mxu0 0
      %1163 = vmatmul.mubr.bf16.gmra.mrb[0].mxu0 %v841
      %v1164 = vpop.f32.mrb[0].mxu0
      %v1165 = vadd.f32 0.0, %v1164
      %v1166 = vpop.f32.mrb[0].mxu0
      %v1167 = vpop.f32.mrb[0].mxu0
      %v1168 = vadd.f32 0.0, %v1167
      %v1169 = vpop.f32.mrb[0].mxu0
      %1170 = vmatprep.mubr.bf16.mxu0 0
      %1171 = vmatmul.mubr.bf16.gmra.mrb[0].mxu0 %v844
      %v1172 = vpop.f32.mrb[0].mxu0
      %v1173 = vadd.f32 0.0, %v1172
      %v1174 = vpop.f32.mrb[0].mxu0
      %v1175 = vpop.f32.mrb[0].mxu0
      %v1176 = vadd.f32 0.0, %v1175
      %v1177 = vpop.f32.mrb[0].mxu0
      %1178 = vmatprep.mubr.bf16.mxu0 0
      %1179 = vmatmul.mubr.bf16.gmra.mrb[0].mxu0 %v847
      %v1180 = vpop.f32.mrb[0].mxu0
      %v1181 = vadd.f32 0.0, %v1180
      %v1182 = vpop.f32.mrb[0].mxu0
      %v1183 = vpop.f32.mrb[0].mxu0
      %v1184 = vadd.f32 0.0, %v1183
      %v1185 = vpop.f32.mrb[0].mxu0
      %1186 = vdwg.mxu0
      %v1187 = vmul.f32 %v457, %v899
      %v1188 = vmul.f32 %v459, %v901
      %v1189 = vmul.f32 %v570, %v1012
      %v1190 = vmul.f32 %v572, %v1014
      %v1191 = vmul.f32 %v683, %v1125
      %v1192 = vmul.f32 %v461, %v903
      %v1193 = vmul.f32 %v463, %v905
      %v1194 = vmul.f32 %v574, %v1016
      %v1195 = vmul.f32 %v576, %v1018
      %v1196 = vmul.f32 %v686, %v1128
      %v1197 = vmul.f32 %v467, %v909
      %v1198 = vmul.f32 %v469, %v911
      %v1199 = vmul.f32 %v580, %v1022
      %v1200 = vmul.f32 %v582, %v1024
      %v1201 = vmul.f32 %v691, %v1133
      %v1202 = vmul.f32 %v471, %v913
      %v1203 = vmul.f32 %v473, %v915
      %v1204 = vmul.f32 %v584, %v1026
      %v1205 = vmul.f32 %v586, %v1028
      %v1206 = vmul.f32 %v694, %v1136
      %v1207 = vmul.f32 %v477, %v919
      %v1208 = vmul.f32 %v479, %v921
      %v1209 = vmul.f32 %v590, %v1032
      %v1210 = vmul.f32 %v592, %v1034
      %v1211 = vmul.f32 %v699, %v1141
      %v1212 = vmul.f32 %v481, %v923
      %v1213 = vmul.f32 %v483, %v925
      %v1214 = vmul.f32 %v594, %v1036
      %v1215 = vmul.f32 %v596, %v1038
      %v1216 = vmul.f32 %v702, %v1144
      %v1217 = vmul.f32 %v487, %v929
      %v1218 = vmul.f32 %v489, %v931
      %v1219 = vmul.f32 %v600, %v1042
      %v1220 = vmul.f32 %v602, %v1044
      %v1221 = vmul.f32 %v707, %v1149
      %v1222 = vmul.f32 %v491, %v933
      %v1223 = vmul.f32 %v493, %v935
      %v1224 = vmul.f32 %v604, %v1046
      %v1225 = vmul.f32 %v606, %v1048
      %v1226 = vmul.f32 %v710, %v1152
      %v1227 = vmul.f32 %v497, %v939
      %v1228 = vmul.f32 %v499, %v941
      %v1229 = vmul.f32 %v610, %v1052
      %v1230 = vmul.f32 %v612, %v1054
      %v1231 = vmul.f32 %v715, %v1157
      %v1232 = vmul.f32 %v501, %v943
      %v1233 = vmul.f32 %v503, %v945
      %v1234 = vmul.f32 %v614, %v1056
      %v1235 = vmul.f32 %v616, %v1058
      %v1236 = vmul.f32 %v718, %v1160
      %v1237 = vmul.f32 %v507, %v949
      %v1238 = vmul.f32 %v509, %v951
      %v1239 = vmul.f32 %v620, %v1062
      %v1240 = vmul.f32 %v622, %v1064
      %v1241 = vmul.f32 %v723, %v1165
      %v1242 = vmul.f32 %v511, %v953
      %v1243 = vmul.f32 %v513, %v955
      %v1244 = vmul.f32 %v624, %v1066
      %v1245 = vmul.f32 %v626, %v1068
      %v1246 = vmul.f32 %v726, %v1168
      %v1247 = vmul.f32 %v517, %v959
      %v1248 = vmul.f32 %v519, %v961
      %v1249 = vmul.f32 %v630, %v1072
      %v1250 = vmul.f32 %v632, %v1074
      %v1251 = vmul.f32 %v731, %v1173
      %v1252 = vmul.f32 %v521, %v963
      %v1253 = vmul.f32 %v523, %v965
      %v1254 = vmul.f32 %v634, %v1076
      %v1255 = vmul.f32 %v636, %v1078
      %v1256 = vmul.f32 %v734, %v1176
      %v1257 = vmul.f32 %v527, %v969
      %v1258 = vmul.f32 %v529, %v971
      %v1259 = vmul.f32 %v640, %v1082
      %v1260 = vmul.f32 %v642, %v1084
      %v1261 = vmul.f32 %v739, %v1181
      %v1262 = vmul.f32 %v531, %v973
      %v1263 = vmul.f32 %v533, %v975
      %v1264 = vmul.f32 %v644, %v1086
      %v1265 = vmul.f32 %v646, %v1088
      %v1266 = vmul.f32 %v742, %v1184
      %v1267 = vld [vmem:[%s4] sm:$0xff]
      %v1268 = vld [vmem:[%s4 + $0x8] sm:$0xff]
      %v1269 = vld [vmem:[%s4 + $0x10] sm:$0xff]
      %v1270 = vld [vmem:[%s4 + $0x18] sm:$0xff]
      %v1271 = vld [vmem:[%s4 + $0x20] sm:$0xff]
      %v1272 = vld [vmem:[%s4 + $0x28] sm:$0xff]
      %v1273 = vld [vmem:[%s4 + $0x30] sm:$0xff]
      %v1274 = vld [vmem:[%s4 + $0x38] sm:$0xff]
      %v1275 = vld [vmem:[%s4 + $0x40] sm:$0xff]
      %v1276 = vld [vmem:[%s4 + $0x48] sm:$0xff]
      %v1277 = vld [vmem:[%s4 + $0x50] sm:$0xff]
      %v1278 = vld [vmem:[%s4 + $0x58] sm:$0xff]
      %v1279 = vld [vmem:[%s4 + $0x60] sm:$0xff]
      %v1280 = vld [vmem:[%s4 + $0x68] sm:$0xff]
      %v1281 = vld [vmem:[%s4 + $0x70] sm:$0xff]
      %v1282 = vld [vmem:[%s4 + $0x78] sm:$0xff]
      %v1283 = vld [vmem:[%s4 + $0x80] sm:$0xff]
      %v1284 = vld [vmem:[%s4 + $0x88] sm:$0xff]
      %v1285 = vld [vmem:[%s4 + $0x90] sm:$0xff]
      %v1286 = vld [vmem:[%s4 + $0x98] sm:$0xff]
      %v1287 = vld [vmem:[%s4 + $0xa0] sm:$0xff]
      %v1288 = vld [vmem:[%s4 + $0xa8] sm:$0xff]
      %v1289 = vld [vmem:[%s4 + $0xb0] sm:$0xff]
      %v1290 = vld [vmem:[%s4 + $0xb8] sm:$0xff]
      %v1291 = vld [vmem:[%s4 + $0xc0] sm:$0xff]
      %v1292 = vld [vmem:[%s4 + $0xc8] sm:$0xff]
      %v1293 = vld [vmem:[%s4 + $0xd0] sm:$0xff]
      %v1294 = vld [vmem:[%s4 + $0xd8] sm:$0xff]
      %v1295 = vld [vmem:[%s4 + $0xe0] sm:$0xff]
      %v1296 = vld [vmem:[%s4 + $0xe8] sm:$0xff]
      %v1297 = vld [vmem:[%s4 + $0xf0] sm:$0xff]
      %v1298 = vld [vmem:[%s4 + $0xf8] sm:$0xff]
      %v1299 = vld [vmem:[%s4 + $0x100] sm:$0xff]
      %v1300 = vld [vmem:[%s4 + $0x108] sm:$0xff]
      %v1301 = vld [vmem:[%s4 + $0x110] sm:$0xff]
      %v1302 = vld [vmem:[%s4 + $0x118] sm:$0xff]
      %v1303 = vld [vmem:[%s4 + $0x120] sm:$0xff]
      %v1304 = vld [vmem:[%s4 + $0x128] sm:$0xff]
      %v1305 = vld [vmem:[%s4 + $0x130] sm:$0xff]
      %v1306 = vld [vmem:[%s4 + $0x138] sm:$0xff]
      %v1307 = vld [vmem:[%s4 + $0x140] sm:$0xff]
      %v1308 = vld [vmem:[%s4 + $0x148] sm:$0xff]
      %v1309 = vld [vmem:[%s4 + $0x150] sm:$0xff]
      %v1310 = vld [vmem:[%s4 + $0x158] sm:$0xff]
      %v1311 = vld [vmem:[%s4 + $0x160] sm:$0xff]
      %v1312 = vld [vmem:[%s4 + $0x168] sm:$0xff]
      %v1313 = vld [vmem:[%s4 + $0x170] sm:$0xff]
      %v1314 = vld [vmem:[%s4 + $0x178] sm:$0xff]
      %v1315 = vld [vmem:[%s4 + $0x180] sm:$0xff]
      %v1316 = vld [vmem:[%s4 + $0x188] sm:$0xff]
      %v1317 = vld [vmem:[%s4 + $0x190] sm:$0xff]
      %v1318 = vld [vmem:[%s4 + $0x198] sm:$0xff]
      %v1319 = vld [vmem:[%s4 + $0x1a0] sm:$0xff]
      %v1320 = vld [vmem:[%s4 + $0x1a8] sm:$0xff]
      %v1321 = vld [vmem:[%s4 + $0x1b0] sm:$0xff]
      %v1322 = vld [vmem:[%s4 + $0x1b8] sm:$0xff]
      %v1323 = vld [vmem:[%s4 + $0x1c0] sm:$0xff]
      %v1324 = vld [vmem:[%s4 + $0x1c8] sm:$0xff]
      %v1325 = vld [vmem:[%s4 + $0x1d0] sm:$0xff]
      %v1326 = vld [vmem:[%s4 + $0x1d8] sm:$0xff]
      %v1327 = vld [vmem:[%s4 + $0x1e0] sm:$0xff]
      %v1328 = vld [vmem:[%s4 + $0x1e8] sm:$0xff]
      %v1329 = vld [vmem:[%s4 + $0x1f0] sm:$0xff]
      %v1330 = vld [vmem:[%s4 + $0x1f8] sm:$0xff]
      %v1331 = vld [vmem:[%s4 + $0x200] sm:$0xff]
      %v1332 = vld [vmem:[%s4 + $0x208] sm:$0xff]
      %vm1333 = vcmask 130048
      %v1335 = vsel %vm1333, %v1191, 0
      %v1338 = vsel %vm1333, %v1196, 0
      %v1341 = vsel %vm1333, %v1201, 0
      %v1344 = vsel %vm1333, %v1206, 0
      %v1347 = vsel %vm1333, %v1211, 0
      %v1350 = vsel %vm1333, %v1216, 0
      %v1353 = vsel %vm1333, %v1221, 0
      %v1356 = vsel %vm1333, %v1226, 0
      %v1359 = vsel %vm1333, %v1231, 0
      %v1362 = vsel %vm1333, %v1236, 0
      %v1365 = vsel %vm1333, %v1241, 0
      %v1368 = vsel %vm1333, %v1246, 0
      %v1371 = vsel %vm1333, %v1251, 0
      %v1374 = vsel %vm1333, %v1256, 0
      %v1377 = vsel %vm1333, %v1261, 0
      %v1380 = vsel %vm1333, %v1266, 0
      %1382 = vmatprep.subr.mxu0 0.0
      %1383 = vmatpush1.msra.mxu0 %v1267
      %1384 = vmatprep.subr.mxu0 0.0
      %1385 = vmatpush1.msra.mxu0 %v1268
      %1386 = vmatprep.subr.mxu0 0.0
      %1387 = vmatpush1.msra.mxu0 %v1269
      %1388 = vmatprep.subr.mxu0 0.0
      %1389 = vmatpush1.msra.mxu0 %v1270
      %1390 = vmatprep.subr.mxu0 0.0
      %1391 = vmatpush1.msra.mxu0 %v1271
      %1392 = vmatprep.subr.mxu0 0.0
      %1393 = vmatpush1.msra.mxu0 %v1272
      %1394 = vmatprep.subr.mxu0 0.0
      %1395 = vmatpush1.msra.mxu0 %v1273
      %1396 = vmatprep.subr.mxu0 0.0
      %1397 = vmatpush1.msra.mxu0 %v1274
      %1398 = vmatprep.subr.mxu0 0.0
      %1399 = vmatpush1.msra.mxu0 %v1275
      %1400 = vmatprep.subr.mxu0 0.0
      %1401 = vmatpush1.msra.mxu0 %v1276
      %1402 = vmatprep.subr.mxu0 0.0
      %1403 = vmatpush1.msra.mxu0 %v1277
      %1404 = vmatprep.subr.mxu0 0.0
      %1405 = vmatpush1.msra.mxu0 %v1278
      %1406 = vmatprep.subr.mxu0 0.0
      %1407 = vmatpush1.msra.mxu0 %v1279
      %1408 = vmatprep.subr.mxu0 0.0
      %1409 = vmatpush1.msra.mxu0 %v1280
      %1410 = vmatprep.subr.mxu0 0.0
      %1411 = vmatpush1.msra.mxu0 %v1281
      %1412 = vmatprep.subr.mxu0 0.0
      %1413 = vmatpush1.msra.mxu0 %v1282
      %1414 = vmatprep.subr.mxu0 0.0
      %1415 = vmatpush1.msra.mxu0 %v1283
      %1416 = vmatprep.subr.mxu0 0.0
      %1417 = vmatpush1.msra.mxu0 %v1284
      %1418 = vmatprep.subr.mxu0 0.0
      %1419 = vmatpush1.msra.mxu0 %v1285
      %1420 = vmatprep.subr.mxu0 0.0
      %1421 = vmatpush1.msra.mxu0 %v1286
      %1422 = vmatprep.subr.mxu0 0.0
      %1423 = vmatpush1.msra.mxu0 %v1287
      %1424 = vmatprep.subr.mxu0 0.0
      %1425 = vmatpush1.msra.mxu0 %v1288
      %1426 = vmatprep.subr.mxu0 0.0
      %1427 = vmatpush1.msra.mxu0 %v1289
      %1428 = vmatprep.subr.mxu0 0.0
      %1429 = vmatpush1.msra.mxu0 %v1290
      %1430 = vmatprep.subr.mxu0 0.0
      %1431 = vmatpush1.msra.mxu0 %v1291
      %1432 = vmatprep.subr.mxu0 0.0
      %1433 = vmatpush1.msra.mxu0 %v1292
      %1434 = vmatprep.subr.mxu0 0.0
      %1435 = vmatpush1.msra.mxu0 %v1293
      %1436 = vmatprep.subr.mxu0 0.0
      %1437 = vmatpush1.msra.mxu0 %v1294
      %1438 = vmatprep.subr.mxu0 0.0
      %1439 = vmatpush1.msra.mxu0 %v1295
      %1440 = vmatprep.subr.mxu0 0.0
      %1441 = vmatpush1.msra.mxu0 %v1296
      %1442 = vmatprep.subr.mxu0 0.0
      %1443 = vmatpush1.msra.mxu0 %v1297
      %1444 = vmatprep.subr.mxu0 0.0
      %1445 = vmatpush1.msra.mxu0 %v1298
      %1446 = vmatprep.mubr.f32.mxu0 %v1188
      %1447 = vmatmul.mubr.f32.gmra.mrb[0].mxu0 %v1187
      %v1448 = vpop.f32.mrb[0].mxu0
      %v1449 = vadd.f32 0.0, %v1448
      %v1450 = vpop.f32.mrb[0].mxu0
      %1451 = vmatprep.mubr.f32.mxu0 %v1193
      %1452 = vmatmul.mubr.f32.gmra.mrb[0].mxu0 %v1192
      %v1453 = vpop.f32.mrb[0].mxu0
      %v1454 = vadd.f32 0.0, %v1453
      %v1455 = vpop.f32.mrb[0].mxu0
      %1456 = vmatprep.mubr.f32.mxu0 %v1198
      %1457 = vmatmul.mubr.f32.gmra.mrb[0].mxu0 %v1197
      %v1458 = vpop.f32.mrb[0].mxu0
      %v1459 = vadd.f32 0.0, %v1458
      %v1460 = vpop.f32.mrb[0].mxu0
      %1461 = vmatprep.mubr.f32.mxu0 %v1203
      %1462 = vmatmul.mubr.f32.gmra.mrb[0].mxu0 %v1202
      %v1463 = vpop.f32.mrb[0].mxu0
      %v1464 = vadd.f32 0.0, %v1463
      %v1465 = vpop.f32.mrb[0].mxu0
      %1466 = vmatprep.mubr.f32.mxu0 %v1208
      %1467 = vmatmul.mubr.f32.gmra.mrb[0].mxu0 %v1207
      %v1468 = vpop.f32.mrb[0].mxu0
      %v1469 = vadd.f32 0.0, %v1468
      %v1470 = vpop.f32.mrb[0].mxu0
      %1471 = vmatprep.mubr.f32.mxu0 %v1213
      %1472 = vmatmul.mubr.f32.gmra.mrb[0].mxu0 %v1212
      %v1473 = vpop.f32.mrb[0].mxu0
      %v1474 = vadd.f32 0.0, %v1473
      %v1475 = vpop.f32.mrb[0].mxu0
      %1476 = vmatprep.mubr.f32.mxu0 %v1218
      %1477 = vmatmul.mubr.f32.gmra.mrb[0].mxu0 %v1217
      %v1478 = vpop.f32.mrb[0].mxu0
      %v1479 = vadd.f32 0.0, %v1478
      %v1480 = vpop.f32.mrb[0].mxu0
      %1481 = vmatprep.mubr.f32.mxu0 %v1223
      %1482 = vmatmul.mubr.f32.gmra.mrb[0].mxu0 %v1222
      %v1483 = vpop.f32.mrb[0].mxu0
      %v1484 = vadd.f32 0.0, %v1483
      %v1485 = vpop.f32.mrb[0].mxu0
      %1486 = vmatprep.mubr.f32.mxu0 %v1228
      %1487 = vmatmul.mubr.f32.gmra.mrb[0].mxu0 %v1227
      %v1488 = vpop.f32.mrb[0].mxu0
      %v1489 = vadd.f32 0.0, %v1488
      %v1490 = vpop.f32.mrb[0].mxu0
      %1491 = vmatprep.mubr.f32.mxu0 %v1233
      %1492 = vmatmul.mubr.f32.gmra.mrb[0].mxu0 %v1232
      %v1493 = vpop.f32.mrb[0].mxu0
      %v1494 = vadd.f32 0.0, %v1493
      %v1495 = vpop.f32.mrb[0].mxu0
      %1496 = vmatprep.mubr.f32.mxu0 %v1238
      %1497 = vmatmul.mubr.f32.gmra.mrb[0].mxu0 %v1237
      %v1498 = vpop.f32.mrb[0].mxu0
      %v1499 = vadd.f32 0.0, %v1498
      %v1500 = vpop.f32.mrb[0].mxu0
      %1501 = vmatprep.mubr.f32.mxu0 %v1243
      %1502 = vmatmul.mubr.f32.gmra.mrb[0].mxu0 %v1242
      %v1503 = vpop.f32.mrb[0].mxu0
      %v1504 = vadd.f32 0.0, %v1503
      %v1505 = vpop.f32.mrb[0].mxu0
      %1506 = vmatprep.mubr.f32.mxu0 %v1248
      %1507 = vmatmul.mubr.f32.gmra.mrb[0].mxu0 %v1247
      %v1508 = vpop.f32.mrb[0].mxu0
      %v1509 = vadd.f32 0.0, %v1508
      %v1510 = vpop.f32.mrb[0].mxu0
      %1511 = vmatprep.mubr.f32.mxu0 %v1253
      %1512 = vmatmul.mubr.f32.gmra.mrb[0].mxu0 %v1252
      %v1513 = vpop.f32.mrb[0].mxu0
      %v1514 = vadd.f32 0.0, %v1513
      %v1515 = vpop.f32.mrb[0].mxu0
      %1516 = vmatprep.mubr.f32.mxu0 %v1258
      %1517 = vmatmul.mubr.f32.gmra.mrb[0].mxu0 %v1257
      %v1518 = vpop.f32.mrb[0].mxu0
      %v1519 = vadd.f32 0.0, %v1518
      %v1520 = vpop.f32.mrb[0].mxu0
      %1521 = vmatprep.mubr.f32.mxu0 %v1263
      %1522 = vmatmul.mubr.f32.gmra.mrb[0].mxu0 %v1262
      %v1523 = vpop.f32.mrb[0].mxu0
      %v1524 = vadd.f32 0.0, %v1523
      %v1525 = vpop.f32.mrb[0].mxu0
      %1526 = vdwg.mxu0
      %1527 = vmatprep.subr.mxu0 0.0
      %1528 = vmatpush1.msra.mxu0 %v1299
      %1529 = vmatprep.subr.mxu0 0.0
      %1530 = vmatpush1.msra.mxu0 %v1300
      %1531 = vmatprep.subr.mxu0 0.0
      %1532 = vmatpush1.msra.mxu0 %v1301
      %1533 = vmatprep.subr.mxu0 0.0
      %1534 = vmatpush1.msra.mxu0 %v1302
      %1535 = vmatprep.subr.mxu0 0.0
      %1536 = vmatpush1.msra.mxu0 %v1303
      %1537 = vmatprep.subr.mxu0 0.0
      %1538 = vmatpush1.msra.mxu0 %v1304
      %1539 = vmatprep.subr.mxu0 0.0
      %1540 = vmatpush1.msra.mxu0 %v1305
      %1541 = vmatprep.subr.mxu0 0.0
      %1542 = vmatpush1.msra.mxu0 %v1306
      %1543 = vmatprep.subr.mxu0 0.0
      %1544 = vmatpush1.msra.mxu0 %v1307
      %1545 = vmatprep.subr.mxu0 0.0
      %1546 = vmatpush1.msra.mxu0 %v1308
      %1547 = vmatprep.subr.mxu0 0.0
      %1548 = vmatpush1.msra.mxu0 %v1309
      %1549 = vmatprep.subr.mxu0 0.0
      %1550 = vmatpush1.msra.mxu0 %v1310
      %1551 = vmatprep.subr.mxu0 0.0
      %1552 = vmatpush1.msra.mxu0 %v1311
      %1553 = vmatprep.subr.mxu0 0.0
      %1554 = vmatpush1.msra.mxu0 %v1312
      %1555 = vmatprep.subr.mxu0 0.0
      %1556 = vmatpush1.msra.mxu0 %v1313
      %1557 = vmatprep.subr.mxu0 0.0
      %1558 = vmatpush1.msra.mxu0 %v1314
      %1559 = vmatprep.subr.mxu0 0.0
      %1560 = vmatpush1.msra.mxu0 %v1315
      %1561 = vmatprep.subr.mxu0 0.0
      %1562 = vmatpush1.msra.mxu0 %v1316
      %1563 = vmatprep.subr.mxu0 0.0
      %1564 = vmatpush1.msra.mxu0 %v1317
      %1565 = vmatprep.subr.mxu0 0.0
      %1566 = vmatpush1.msra.mxu0 %v1318
      %1567 = vmatprep.subr.mxu0 0.0
      %1568 = vmatpush1.msra.mxu0 %v1319
      %1569 = vmatprep.subr.mxu0 0.0
      %1570 = vmatpush1.msra.mxu0 %v1320
      %1571 = vmatprep.subr.mxu0 0.0
      %1572 = vmatpush1.msra.mxu0 %v1321
      %1573 = vmatprep.subr.mxu0 0.0
      %1574 = vmatpush1.msra.mxu0 %v1322
      %1575 = vmatprep.subr.mxu0 0.0
      %1576 = vmatpush1.msra.mxu0 %v1323
      %1577 = vmatprep.subr.mxu0 0.0
      %1578 = vmatpush1.msra.mxu0 %v1324
      %1579 = vmatprep.subr.mxu0 0.0
      %1580 = vmatpush1.msra.mxu0 %v1325
      %1581 = vmatprep.subr.mxu0 0.0
      %1582 = vmatpush1.msra.mxu0 %v1326
      %1583 = vmatprep.subr.mxu0 0.0
      %1584 = vmatpush1.msra.mxu0 %v1327
      %1585 = vmatprep.subr.mxu0 0.0
      %1586 = vmatpush1.msra.mxu0 %v1328
      %1587 = vmatprep.subr.mxu0 0.0
      %1588 = vmatpush1.msra.mxu0 %v1329
      %1589 = vmatprep.subr.mxu0 0.0
      %1590 = vmatpush1.msra.mxu0 %v1330
      %1591 = vmatprep.mubr.f32.mxu0 %v1190
      %1592 = vmatmul.mubr.f32.gmra.mrb[0].mxu0 %v1189
      %v1593 = vpop.f32.mrb[0].mxu0
      %v1594 = vadd.f32 %v1449, %v1593
      %v1595 = vpop.f32.mrb[0].mxu0
      %1596 = vmatprep.mubr.f32.mxu0 %v1195
      %1597 = vmatmul.mubr.f32.gmra.mrb[0].mxu0 %v1194
      %v1598 = vpop.f32.mrb[0].mxu0
      %v1599 = vadd.f32 %v1454, %v1598
      %v1600 = vpop.f32.mrb[0].mxu0
      %1601 = vmatprep.mubr.f32.mxu0 %v1200
      %1602 = vmatmul.mubr.f32.gmra.mrb[0].mxu0 %v1199
      %v1603 = vpop.f32.mrb[0].mxu0
      %v1604 = vadd.f32 %v1459, %v1603
      %v1605 = vpop.f32.mrb[0].mxu0
      %1606 = vmatprep.mubr.f32.mxu0 %v1205
      %1607 = vmatmul.mubr.f32.gmra.mrb[0].mxu0 %v1204
      %v1608 = vpop.f32.mrb[0].mxu0
      %v1609 = vadd.f32 %v1464, %v1608
      %v1610 = vpop.f32.mrb[0].mxu0
      %1611 = vmatprep.mubr.f32.mxu0 %v1210
      %1612 = vmatmul.mubr.f32.gmra.mrb[0].mxu0 %v1209
      %v1613 = vpop.f32.mrb[0].mxu0
      %v1614 = vadd.f32 %v1469, %v1613
      %v1615 = vpop.f32.mrb[0].mxu0
      %1616 = vmatprep.mubr.f32.mxu0 %v1215
      %1617 = vmatmul.mubr.f32.gmra.mrb[0].mxu0 %v1214
      %v1618 = vpop.f32.mrb[0].mxu0
      %v1619 = vadd.f32 %v1474, %v1618
      %v1620 = vpop.f32.mrb[0].mxu0
      %1621 = vmatprep.mubr.f32.mxu0 %v1220
      %1622 = vmatmul.mubr.f32.gmra.mrb[0].mxu0 %v1219
      %v1623 = vpop.f32.mrb[0].mxu0
      %v1624 = vadd.f32 %v1479, %v1623
      %v1625 = vpop.f32.mrb[0].mxu0
      %1626 = vmatprep.mubr.f32.mxu0 %v1225
      %1627 = vmatmul.mubr.f32.gmra.mrb[0].mxu0 %v1224
      %v1628 = vpop.f32.mrb[0].mxu0
      %v1629 = vadd.f32 %v1484, %v1628
      %v1630 = vpop.f32.mrb[0].mxu0
      %1631 = vmatprep.mubr.f32.mxu0 %v1230
      %1632 = vmatmul.mubr.f32.gmra.mrb[0].mxu0 %v1229
      %v1633 = vpop.f32.mrb[0].mxu0
      %v1634 = vadd.f32 %v1489, %v1633
      %v1635 = vpop.f32.mrb[0].mxu0
      %1636 = vmatprep.mubr.f32.mxu0 %v1235
      %1637 = vmatmul.mubr.f32.gmra.mrb[0].mxu0 %v1234
      %v1638 = vpop.f32.mrb[0].mxu0
      %v1639 = vadd.f32 %v1494, %v1638
      %v1640 = vpop.f32.mrb[0].mxu0
      %1641 = vmatprep.mubr.f32.mxu0 %v1240
      %1642 = vmatmul.mubr.f32.gmra.mrb[0].mxu0 %v1239
      %v1643 = vpop.f32.mrb[0].mxu0
      %v1644 = vadd.f32 %v1499, %v1643
      %v1645 = vpop.f32.mrb[0].mxu0
      %1646 = vmatprep.mubr.f32.mxu0 %v1245
      %1647 = vmatmul.mubr.f32.gmra.mrb[0].mxu0 %v1244
      %v1648 = vpop.f32.mrb[0].mxu0
      %v1649 = vadd.f32 %v1504, %v1648
      %v1650 = vpop.f32.mrb[0].mxu0
      %1651 = vmatprep.mubr.f32.mxu0 %v1250
      %1652 = vmatmul.mubr.f32.gmra.mrb[0].mxu0 %v1249
      %v1653 = vpop.f32.mrb[0].mxu0
      %v1654 = vadd.f32 %v1509, %v1653
      %v1655 = vpop.f32.mrb[0].mxu0
      %1656 = vmatprep.mubr.f32.mxu0 %v1255
      %1657 = vmatmul.mubr.f32.gmra.mrb[0].mxu0 %v1254
      %v1658 = vpop.f32.mrb[0].mxu0
      %v1659 = vadd.f32 %v1514, %v1658
      %v1660 = vpop.f32.mrb[0].mxu0
      %1661 = vmatprep.mubr.f32.mxu0 %v1260
      %1662 = vmatmul.mubr.f32.gmra.mrb[0].mxu0 %v1259
      %v1663 = vpop.f32.mrb[0].mxu0
      %v1664 = vadd.f32 %v1519, %v1663
      %v1665 = vpop.f32.mrb[0].mxu0
      %1666 = vmatprep.mubr.f32.mxu0 %v1265
      %1667 = vmatmul.mubr.f32.gmra.mrb[0].mxu0 %v1264
      %v1668 = vpop.f32.mrb[0].mxu0
      %v1669 = vadd.f32 %v1524, %v1668
      %v1670 = vpop.f32.mrb[0].mxu0
      %1671 = vdwg.mxu0
      %1672 = vmatprep.subr.mxu0 0.0
      %1673 = vmatpush1.msra.mxu0 %v1331
      %1674 = vmatprep.subr.mxu0 0.0
      %1675 = vmatpush1.msra.mxu0 %v1332
      %1676 = vmatprep.subr.mxu0 0.0
      %1677 = vmatpush1.msra.mxu0 0.0
      %1678 = vmatprep.subr.mxu0 0.0
      %1679 = vmatpush1.msra.mxu0 0.0
      %1680 = vmatprep.subr.mxu0 0.0
      %1681 = vmatpush1.msra.mxu0 0.0
      %1682 = vmatprep.subr.mxu0 0.0
      %1683 = vmatpush1.msra.mxu0 0.0
      %1684 = vmatprep.subr.mxu0 0.0
      %1685 = vmatpush1.msra.mxu0 0.0
      %1686 = vmatprep.subr.mxu0 0.0
      %1687 = vmatpush1.msra.mxu0 0.0
      %1688 = vmatprep.subr.mxu0 0.0
      %1689 = vmatpush1.msra.mxu0 0.0
      %1690 = vmatprep.subr.mxu0 0.0
      %1691 = vmatpush1.msra.mxu0 0.0
      %1692 = vmatprep.subr.mxu0 0.0
      %1693 = vmatpush1.msra.mxu0 0.0
      %1694 = vmatprep.subr.mxu0 0.0
      %1695 = vmatpush1.msra.mxu0 0.0
      %1696 = vmatprep.subr.mxu0 0.0
      %1697 = vmatpush1.msra.mxu0 0.0
      %1698 = vmatprep.subr.mxu0 0.0
      %1699 = vmatpush1.msra.mxu0 0.0
      %1700 = vmatprep.subr.mxu0 0.0
      %1701 = vmatpush1.msra.mxu0 0.0
      %1702 = vmatprep.subr.mxu0 0.0
      %1703 = vmatpush1.msra.mxu0 0.0
      %1704 = vmatprep.subr.mxu0 0.0
      %1705 = vmatpush1.msra.mxu0 0.0
      %1706 = vmatprep.subr.mxu0 0.0
      %1707 = vmatpush1.msra.mxu0 0.0
      %1708 = vmatprep.subr.mxu0 0.0
      %1709 = vmatpush1.msra.mxu0 0.0
      %1710 = vmatprep.subr.mxu0 0.0
      %1711 = vmatpush1.msra.mxu0 0.0
      %1712 = vmatprep.subr.mxu0 0.0
      %1713 = vmatpush1.msra.mxu0 0.0
      %1714 = vmatprep.subr.mxu0 0.0
      %1715 = vmatpush1.msra.mxu0 0.0
      %1716 = vmatprep.subr.mxu0 0.0
      %1717 = vmatpush1.msra.mxu0 0.0
      %1718 = vmatprep.subr.mxu0 0.0
      %1719 = vmatpush1.msra.mxu0 0.0
      %1720 = vmatprep.subr.mxu0 0.0
      %1721 = vmatpush1.msra.mxu0 0.0
      %1722 = vmatprep.subr.mxu0 0.0
      %1723 = vmatpush1.msra.mxu0 0.0
      %1724 = vmatprep.subr.mxu0 0.0
      %1725 = vmatpush1.msra.mxu0 0.0
      %1726 = vmatprep.subr.mxu0 0.0
      %1727 = vmatpush1.msra.mxu0 0.0
      %1728 = vmatprep.subr.mxu0 0.0
      %1729 = vmatpush1.msra.mxu0 0.0
      %1730 = vmatprep.subr.mxu0 0.0
      %1731 = vmatpush1.msra.mxu0 0.0
      %1732 = vmatprep.subr.mxu0 0.0
      %1733 = vmatpush1.msra.mxu0 0.0
      %1734 = vmatprep.subr.mxu0 0.0
      %1735 = vmatpush1.msra.mxu0 0.0
      %1736 = vmatprep.mubr.f32.mxu0 0.0
      %1737 = vmatmul.mubr.f32.gmra.mrb[0].mxu0 %v1335
      %v1738 = vpop.f32.mrb[0].mxu0
      %v1739 = vadd.f32 %v1594, %v1738
      %v1740 = vpop.f32.mrb[0].mxu0
      %1741 = vmatprep.mubr.f32.mxu0 0.0
      %1742 = vmatmul.mubr.f32.gmra.mrb[0].mxu0 %v1338
      %v1743 = vpop.f32.mrb[0].mxu0
      %v1744 = vadd.f32 %v1599, %v1743
      %v1745 = vpop.f32.mrb[0].mxu0
      %1746 = vmatprep.mubr.f32.mxu0 0.0
      %1747 = vmatmul.mubr.f32.gmra.mrb[0].mxu0 %v1341
      %v1748 = vpop.f32.mrb[0].mxu0
      %v1749 = vadd.f32 %v1604, %v1748
      %v1750 = vpop.f32.mrb[0].mxu0
      %1751 = vmatprep.mubr.f32.mxu0 0.0
      %1752 = vmatmul.mubr.f32.gmra.mrb[0].mxu0 %v1344
      %v1753 = vpop.f32.mrb[0].mxu0
      %v1754 = vadd.f32 %v1609, %v1753
      %v1755 = vpop.f32.mrb[0].mxu0
      %1756 = vmatprep.mubr.f32.mxu0 0.0
      %1757 = vmatmul.mubr.f32.gmra.mrb[0].mxu0 %v1347
      %v1758 = vpop.f32.mrb[0].mxu0
      %v1759 = vadd.f32 %v1614, %v1758
      %v1760 = vpop.f32.mrb[0].mxu0
      %1761 = vmatprep.mubr.f32.mxu0 0.0
      %1762 = vmatmul.mubr.f32.gmra.mrb[0].mxu0 %v1350
      %v1763 = vpop.f32.mrb[0].mxu0
      %v1764 = vadd.f32 %v1619, %v1763
      %v1765 = vpop.f32.mrb[0].mxu0
      %1766 = vmatprep.mubr.f32.mxu0 0.0
      %1767 = vmatmul.mubr.f32.gmra.mrb[0].mxu0 %v1353
      %v1768 = vpop.f32.mrb[0].mxu0
      %v1769 = vadd.f32 %v1624, %v1768
      %v1770 = vpop.f32.mrb[0].mxu0
      %1771 = vmatprep.mubr.f32.mxu0 0.0
      %1772 = vmatmul.mubr.f32.gmra.mrb[0].mxu0 %v1356
      %v1773 = vpop.f32.mrb[0].mxu0
      %v1774 = vadd.f32 %v1629, %v1773
      %v1775 = vpop.f32.mrb[0].mxu0
      %1776 = vmatprep.mubr.f32.mxu0 0.0
      %1777 = vmatmul.mubr.f32.gmra.mrb[0].mxu0 %v1359
      %v1778 = vpop.f32.mrb[0].mxu0
      %v1779 = vadd.f32 %v1634, %v1778
      %v1780 = vpop.f32.mrb[0].mxu0
      %1781 = vmatprep.mubr.f32.mxu0 0.0
      %1782 = vmatmul.mubr.f32.gmra.mrb[0].mxu0 %v1362
      %v1783 = vpop.f32.mrb[0].mxu0
      %v1784 = vadd.f32 %v1639, %v1783
      %v1785 = vpop.f32.mrb[0].mxu0
      %1786 = vmatprep.mubr.f32.mxu0 0.0
      %1787 = vmatmul.mubr.f32.gmra.mrb[0].mxu0 %v1365
      %v1788 = vpop.f32.mrb[0].mxu0
      %v1789 = vadd.f32 %v1644, %v1788
      %v1790 = vpop.f32.mrb[0].mxu0
      %1791 = vmatprep.mubr.f32.mxu0 0.0
      %1792 = vmatmul.mubr.f32.gmra.mrb[0].mxu0 %v1368
      %v1793 = vpop.f32.mrb[0].mxu0
      %v1794 = vadd.f32 %v1649, %v1793
      %v1795 = vpop.f32.mrb[0].mxu0
      %1796 = vmatprep.mubr.f32.mxu0 0.0
      %1797 = vmatmul.mubr.f32.gmra.mrb[0].mxu0 %v1371
      %v1798 = vpop.f32.mrb[0].mxu0
      %v1799 = vadd.f32 %v1654, %v1798
      %v1800 = vpop.f32.mrb[0].mxu0
      %1801 = vmatprep.mubr.f32.mxu0 0.0
      %1802 = vmatmul.mubr.f32.gmra.mrb[0].mxu0 %v1374
      %v1803 = vpop.f32.mrb[0].mxu0
      %v1804 = vadd.f32 %v1659, %v1803
      %v1805 = vpop.f32.mrb[0].mxu0
      %1806 = vmatprep.mubr.f32.mxu0 0.0
      %1807 = vmatmul.mubr.f32.gmra.mrb[0].mxu0 %v1377
      %v1808 = vpop.f32.mrb[0].mxu0
      %v1809 = vadd.f32 %v1664, %v1808
      %v1810 = vpop.f32.mrb[0].mxu0
      %1811 = vmatprep.mubr.f32.mxu0 0.0
      %1812 = vmatmul.mubr.f32.gmra.mrb[0].mxu0 %v1380
      %v1813 = vpop.f32.mrb[0].mxu0
      %v1814 = vadd.f32 %v1669, %v1813
      %v1815 = vpop.f32.mrb[0].mxu0
      %1816 = vdwg.mxu0
      %v1817 = vmax.f32 %v1739, 0.0
      %v1818 = vmax.f32 %v1744, 0.0
      %v1819 = vmax.f32 %v1749, 0.0
      %v1820 = vmax.f32 %v1754, 0.0
      %v1821 = vmax.f32 %v1759, 0.0
      %v1822 = vmax.f32 %v1764, 0.0
      %v1823 = vmax.f32 %v1769, 0.0
      %v1824 = vmax.f32 %v1774, 0.0
      %v1825 = vmax.f32 %v1779, 0.0
      %v1826 = vmax.f32 %v1784, 0.0
      %v1827 = vmax.f32 %v1789, 0.0
      %v1828 = vmax.f32 %v1794, 0.0
      %v1829 = vmax.f32 %v1799, 0.0
      %v1830 = vmax.f32 %v1804, 0.0
      %v1831 = vmax.f32 %v1809, 0.0
      %v1832 = vmax.f32 %v1814, 0.0
      %1833 = vst [vmem:[%s248] sm:$0xff] %v1817
      %1834 = vst [vmem:[%s248 + $0x8] sm:$0xff] %v1818
      %1835 = vst [vmem:[%s248 + $0x10] sm:$0xff] %v1819
      %1836 = vst [vmem:[%s248 + $0x18] sm:$0xff] %v1820
      %1837 = vst [vmem:[%s248 + $0x20] sm:$0xff] %v1821
      %1838 = vst [vmem:[%s248 + $0x28] sm:$0xff] %v1822
      %1839 = vst [vmem:[%s248 + $0x30] sm:$0xff] %v1823
      %1840 = vst [vmem:[%s248 + $0x38] sm:$0xff] %v1824
      %1841 = vst [vmem:[%s248 + $0x40] sm:$0xff] %v1825
      %1842 = vst [vmem:[%s248 + $0x48] sm:$0xff] %v1826
      %1843 = vst [vmem:[%s248 + $0x50] sm:$0xff] %v1827
      %1844 = vst [vmem:[%s248 + $0x58] sm:$0xff] %v1828
      %1845 = vst [vmem:[%s248 + $0x60] sm:$0xff] %v1829
      %1846 = vst [vmem:[%s248 + $0x68] sm:$0xff] %v1830
      %1847 = vst [vmem:[%s248 + $0x70] sm:$0xff] %v1831
      %1848 = vst [vmem:[%s248 + $0x78] sm:$0xff] %v1832
      %s1849 = smul.u32 16, %s16
      %p1850 = scmp.lt.s32.totalorder %s1849, 31
      %s1851 = scalar_select %p1850, %s1849, 31
      %s1852 = smul.addr %s1851, 8
      %s1853 = scalar_lea.vmem %s5, %s1852
      // Predicated region
      $region41: #{tensor_network_forward.1} parent=39 // pred_check
        %p1854 = pneg %p149
      $region42: #{tensor_network_forward.1} parent=39 // pred_check_branch
        %1856 = sbr.rel (%p1854) target = $region44
      $region43: #{tensor_network_forward.1} parent=39 // pred_region
        %s1857 = smul.u32 16, %s16
      $region44: #{tensor_network_forward.1} parent=39 // pred_fallthru
        _
    $region40: #{tensor_network_forward.1} parent=5 // pred_fallthru
      _
    %p1858 = scmp.le.s32.totalorder 2, %s11
    // Predicated region
    $region45: #{tensor_network_forward.1} parent=5 // pred_check
      %p1859 = pneg %p1858
    $region46: #{tensor_network_forward.1} parent=5 // pred_check_branch
      %1861 = sbr.rel (%p1859) target = $region48
    $region47: #{tensor_network_forward.1} parent=5 // pred_region
      %s1862 = ssub.s32 %s11, 2
      // Predicated region
      $region49: #{tensor_network_forward.1} parent=47 // pred_check
        %p1863 = pneg %p155
      $region50: #{tensor_network_forward.1} parent=47 // pred_check_branch
        %1865 = sbr.rel (%p1863) target = $region52
      $region51: #{tensor_network_forward.1} parent=47 // pred_region
        %s1866 = smul.u32 16, %s17
        %p1867 = scmp.lt.s32.totalorder %s1866, 31
        %s1868 = scalar_select %p1867, %s1866, 31
        %s1869 = smul.addr %s1868, 8
        %s1870 = scalar_lea.vmem %s5, %s1869
      $region52: #{tensor_network_forward.1} parent=47 // pred_fallthru
        _
    $region48: #{tensor_network_forward.1} parent=5 // pred_fallthru
      _
  $region6: #{tensor_network_forward.1} parent=0 // loop_footer
    %s15 = sadd.s32 1, %s11
  $region7: #{tensor_network_forward.1} parent=0 // loop_footer_branch
    %10 = sbr.rel target = $region3
  $region8: #{tensor_network_forward.1} parent=0 // loop_exit
    _

</llo_original>
